<compile_context>
chip_gen: v7x
topology: tpu7x:2x2x1
jax: 0.10.0
libtpu: 0.0.40
codegen_flags: <defaults>
</compile_context>

<pallas_src>
import math

import jax
import jax.numpy as jnp
import numpy as np
from jax import lax
from jax.experimental import pallas as pl
from jax.experimental.pallas import tpu as pltpu

# ---- module hyper-parameters (small, consistent with the PyTorch module) ----
EMBED_DIM = 32
NUM_HEADS = 4
HEAD_DIM = EMBED_DIM // NUM_HEADS
NUM_BUCKETS = 32
MAX_DISTANCE = 128
BATCH = 2
SEQ = 16


# --------------------------- Pallas kernel ----------------------------------
def _wavlm_attn_kernel(q_ref, pos_ref, w_in_ref, b_in_ref, w_gate_ref, b_gate_ref,
                       g_const_ref, w_out_ref, b_out_ref, out_ref, o_scratch):
    # q_ref     : (B*S, E)    un-projected query, batch folded into rows
    # pos_ref   : (nh, S, S)  relative position bias (shared across batch)
    # w_in_ref  : (E, 3E)     in_proj_weight.T
    # b_in_ref  : (1, 3E)
    # w_gate_ref: (E, 2*nh)   block-diagonal, group-of-4-presummed gru_rel_pos_linear weight
    # b_gate_ref: (1, 2*nh)
    # g_const_ref:(1, nh)     gru_rel_pos_const
    # w_out_ref : (E, E)      out_proj.weight.T
    # b_out_ref : (1, E)
    # out_ref   : (B*S, E)
    # o_scratch : (B*S, E)    VMEM, per-head attention outputs before out-projection
    BS, E = q_ref.shape
    nh, S, _ = pos_ref.shape
    hd = E // nh
    B = BS // S
    scale = 1.0 / math.sqrt(hd)

    q_in = q_ref[...]  # (BS, E)

    # (1) fused QKV projection over ALL batch rows: single MXU push, contraction E, M=B*S.
    qkv = jnp.dot(q_in, w_in_ref[...], preferred_element_type=jnp.float32) + b_in_ref[...]  # (BS, 3E)

    # (2) gated relative-position gate for all heads & batches in one matmul.
    #     Columns [0:nh] give sum(g[:,0:4]) per head, [nh:2nh] give sum(g[:,4:8]).
    gsum = jnp.dot(q_in, w_gate_ref[...], preferred_element_type=jnp.float32) + b_gate_ref[...]  # (BS, 2nh)
    gates = jax.nn.sigmoid(gsum)
    gate_a = gates[:, :nh]                                            # (BS, nh)
    gate_b = gates[:, nh:]                                            # (BS, nh)
    gate_a_1 = gate_a * (gate_b * g_const_ref[...] - 1.0) + 2.0       # (BS, nh)

    # (3) per (head, batch) attention; S=16 / hd=8 are tiny, statically unrolled (nh*B = 8 iters).
    for h in range(nh):
        pos_h = pos_ref[h]                             # (S, S), loaded once per head
        gcol = gate_a_1[:, h:h + 1]                    # (BS, 1)
        q_h = qkv[:, h * hd:(h + 1) * hd]              # (BS, hd)
        k_h = qkv[:, E + h * hd:E + (h + 1) * hd]      # (BS, hd)
        v_h = qkv[:, 2 * E + h * hd:2 * E + (h + 1) * hd]
        for b in range(B):
            rows = slice(b * S, (b + 1) * S)
            qh, kh, vh = q_h[rows], k_h[rows], v_h[rows]      # (S, hd) each
            attn_bias = gcol[rows] * pos_h                    # (S, S)

            # TODO(synk): verify in the Mosaic dump that this (1,)x(1,) contraction does not
            # insert a per-head XLU transpose of kh (noise at S=16/hd=8 either way).
            scores = lax.dot_general(
                qh, kh, (((1,), (1,)), ((), ())),
                preferred_element_type=jnp.float32) * scale + attn_bias   # (S, S)
            m = jnp.max(scores, axis=-1, keepdims=True)
            p = jnp.exp(scores - m)
            inv = pl.reciprocal(jnp.sum(p, axis=-1, keepdims=True), approx=True)  # EUP, off VPU
            oh = jnp.dot(p * inv, vh, preferred_element_type=jnp.float32)         # (S, hd)
            o_scratch[b * S:(b + 1) * S, h * hd:(h + 1) * hd] = oh

    # (4) single output projection with contraction E over all B*S rows.
    out2d = jnp.dot(o_scratch[...], w_out_ref[...],
                    preferred_element_type=jnp.float32) + b_out_ref[...]
    out_ref[...] = out2d.astype(out_ref.dtype)


# --------------------------- position-bias glue -------------------------------
def compute_position_bias(seq_len, rel_attn_embed):
    """Relative-position bucket bias, shape (num_heads, seq, seq). Plain-JAX glue."""
    context = jnp.arange(seq_len, dtype=jnp.int32)[:, None]
    memory = jnp.arange(seq_len, dtype=jnp.int32)[None, :]
    rel = memory - context
    nb = NUM_BUCKETS // 2
    buckets = (rel > 0).astype(jnp.int32) * nb
    rel_abs = jnp.abs(rel)
    max_exact = nb // 2
    is_small = rel_abs < max_exact
    rel_abs_safe = jnp.maximum(rel_abs, 1)   # clamp: avoid log(0) before the where-mask
    rel_if_large = max_exact + (
        jnp.log(rel_abs_safe.astype(jnp.float32) / max_exact)
        / math.log(MAX_DISTANCE / max_exact) * (nb - max_exact)
    ).astype(jnp.int32)
    rel_if_large = jnp.minimum(rel_if_large, nb - 1)
    buckets = buckets + jnp.where(is_small, rel_abs, rel_if_large)
    values = rel_attn_embed[buckets]                 # (S, S, nh)
    return jnp.transpose(values, (2, 0, 1))          # (nh, S, S)


# --------------------------- wrapper -----------------------------------------
def wavlm_self_attention(query, params):
    B, S, E = query.shape
    nh, hd = NUM_HEADS, HEAD_DIM

    pos_bias = compute_position_bias(S, params["rel_attn_embed"])    # (nh, S, S)

    # Pre-transposed projection weights: every in-kernel contraction is row-major x @ W.
    w_in_t = params["in_proj_weight"].T                  # (E, 3E)
    b_in = params["in_proj_bias"][None, :]               # (1, 3E)
    w_out_t = params["out_proj_weight"].T                # (E, E)
    b_out = params["out_proj_bias"][None, :]             # (1, E)

    # Fold gru_rel_pos_linear + ".view(...,2,4).sum(-1)" into one block-diagonal weight.
    # Column h (h < nh)    holds sum(W[0:4]) in rows h*hd:(h+1)*hd  -> pre-sigmoid gate_a sum.
    # Column nh+h          holds sum(W[4:8]) in rows h*hd:(h+1)*hd  -> pre-sigmoid gate_b sum.
    w_a = params["gru_w"][0:4, :].sum(axis=0)            # (hd,)
    w_b = params["gru_w"][4:8, :].sum(axis=0)            # (hd,)
    b_a = params["gru_b"][0:4].sum()
    b_b = params["gru_b"][4:8].sum()
    eye = jnp.eye(nh, dtype=query.dtype)
    w_gate = jnp.concatenate(
        [jnp.kron(eye, w_a[:, None]), jnp.kron(eye, w_b[:, None])], axis=1)   # (E, 2*nh)
    b_gate = jnp.concatenate(
        [jnp.full((nh,), b_a), jnp.full((nh,), b_b)]).astype(query.dtype)[None, :]  # (1, 2*nh)
    g_const = params["gru_const"].reshape(1, nh).astype(jnp.float32)          # (1, nh)

    q2d = query.reshape(B * S, E)   # fold batch into the matmul M dimension

    # Single kernel invocation (no grid): the whole problem is a few KiB, so per-grid-step
    # pipeline overhead would dominate.  On v7x this runs on one TC, which is the right call
    # at this size; a parallel batch grid only pays off if B/S grow.
    attn2d = pl.pallas_call(
        _wavlm_attn_kernel,
        out_shape=jax.ShapeDtypeStruct((B * S, E), query.dtype),
        in_specs=[pl.BlockSpec(memory_space=pltpu.MemorySpace.VMEM)] * 9,
        out_specs=pl.BlockSpec(memory_space=pltpu.MemorySpace.VMEM),
        scratch_shapes=[pltpu.VMEM((B * S, E), jnp.float32)],
    )(q2d, pos_bias, w_in_t, b_in, w_gate, b_gate, g_const, w_out_t, b_out)

    attn_out = attn2d.reshape(B, S, E)
    # module returns position_bias repeated over batch: (B, nh, S, S)
    position_bias_out = jnp.broadcast_to(pos_bias[None], (B, nh, S, S))
    return attn_out, position_bias_out


# --------------------------- pure-JAX reference -------------------------------
def reference(query, params):
    B, S, E = query.shape
    nh, hd = NUM_HEADS, HEAD_DIM
    pos_bias = compute_position_bias(S, params["rel_attn_embed"])   # (nh, S, S)

    q_in = query.reshape(B, S, nh, hd).transpose(0, 2, 1, 3)        # (B, nh, S, hd)
    g = q_in @ params["gru_w"].T + params["gru_b"]                  # (B, nh, S, 8)
    gsum = g.reshape(B, nh, S, 2, 4).sum(-1)
    gate = jax.nn.sigmoid(gsum)
    gate_a, gate_b = gate[..., 0:1], gate[..., 1:2]
    const = params["gru_const"].reshape(1, nh, 1, 1)
    gate_a_1 = gate_a * (gate_b * const - 1.0) + 2.0
    attn_mask = gate_a_1 * pos_bias[None]                           # (B, nh, S, S)

    qkv = query @ params["in_proj_weight"].T + params["in_proj_bias"]
    q, k, v = jnp.split(qkv, 3, axis=-1)
    q = q.reshape(B, S, nh, hd).transpose(0, 2, 1, 3)
    k = k.reshape(B, S, nh, hd).transpose(0, 2, 1, 3)
    v = v.reshape(B, S, nh, hd).transpose(0, 2, 1, 3)
    scores = (q @ jnp.swapaxes(k, -1, -2)) / math.sqrt(hd) + attn_mask
    p = jax.nn.softmax(scores, axis=-1)
    o = (p @ v).transpose(0, 2, 1, 3).reshape(B, S, E)
    out = o @ params["out_proj_weight"].T + params["out_proj_bias"]
    return out, jnp.broadcast_to(pos_bias[None], (B, nh, S, S))


# --------------------------- main ---------------------------------------------
if __name__ == "__main__":
    key = jax.random.PRNGKey(0)
    keys = jax.random.split(key, 8)

    s = 1.0 / math.sqrt(EMBED_DIM)
    params = {
        "in_proj_weight": jax.random.normal(keys[0], (3 * EMBED_DIM, EMBED_DIM), jnp.float32) * s,
        "in_proj_bias": jax.random.normal(keys[1], (3 * EMBED_DIM,), jnp.float32) * 0.1,
        "out_proj_weight": jax.random.normal(keys[2], (EMBED_DIM, EMBED_DIM), jnp.float32) * s,
        "out_proj_bias": jax.random.normal(keys[3], (EMBED_DIM,), jnp.float32) * 0.1,
        "gru_w": jax.random.normal(keys[4], (8, HEAD_DIM), jnp.float32) * (1.0 / math.sqrt(HEAD_DIM)),
        "gru_b": jax.random.normal(keys[5], (8,), jnp.float32) * 0.1,
        "gru_const": jnp.ones((1, NUM_HEADS, 1, 1), jnp.float32),  # nn.Parameter(torch.ones(...))
        "rel_attn_embed": jax.random.normal(keys[6], (NUM_BUCKETS, NUM_HEADS), jnp.float32),
    }

    query = jax.random.normal(keys[7], (BATCH, SEQ, EMBED_DIM), jnp.float32)

    attn_out, pos_bias_out = wavlm_self_attention(query, params)
    attn_out = jax.block_until_ready(attn_out)
    pos_bias_out = jax.block_until_ready(pos_bias_out)

    ref_out, ref_pos = reference(query, params)
    # attention output tolerance allows the EUP approximate-reciprocal softmax normalization
    np.testing.assert_allclose(np.asarray(attn_out), np.asarray(ref_out), rtol=1e-2, atol=1e-2)
    np.testing.assert_allclose(np.asarray(pos_bias_out), np.asarray(ref_pos), rtol=1e-6, atol=1e-6)

    print("KERNEL_OK")
</pallas_src>

<mosaic_0001>
module attributes {stable_mosaic.version = 11 : i64} {
  func.func @_wavlm_attn_kernel(%arg0: memref<32x32xf32, #tpu.memory_space<vmem>>, %arg1: memref<4x16x16xf32, #tpu.memory_space<vmem>>, %arg2: memref<32x96xf32, #tpu.memory_space<vmem>>, %arg3: memref<1x96xf32, #tpu.memory_space<vmem>>, %arg4: memref<32x8xf32, #tpu.memory_space<vmem>>, %arg5: memref<1x8xf32, #tpu.memory_space<vmem>>, %arg6: memref<1x4xf32, #tpu.memory_space<vmem>>, %arg7: memref<32x32xf32, #tpu.memory_space<vmem>>, %arg8: memref<1x32xf32, #tpu.memory_space<vmem>>, %arg9: memref<32x32xf32, #tpu.memory_space<vmem>>, %arg10: memref<32x32xf32, #tpu.memory_space<vmem>>) attributes {dimension_semantics = [], scalar_prefetch = 0 : i64, scratch_operands = 1 : i64, tpu.core_type = #tpu.core_type<tc>} {
    %c0 = arith.constant 0 : index
    %c0_0 = arith.constant 0 : index
    %0 = vector.load %arg0[%c0, %c0_0] : memref<32x32xf32, #tpu.memory_space<vmem>>, vector<32x32xf32>
    %c0_1 = arith.constant 0 : index
    %c0_2 = arith.constant 0 : index
    %1 = vector.load %arg2[%c0_1, %c0_2] : memref<32x96xf32, #tpu.memory_space<vmem>>, vector<32x96xf32>
    %cst = arith.constant dense<0.000000e+00> : vector<32x96xf32>
    %2 = tpu.matmul %0, %1, %cst {dimension_numbers = #tpu.dot_dimension_numbers<[1], [0], [0], [1], [0, 0, 1, 1], [], []>} : vector<32x32xf32>, vector<32x96xf32>, vector<32x96xf32> -> vector<32x96xf32>
    %c0_3 = arith.constant 0 : index
    %c0_4 = arith.constant 0 : index
    %3 = vector.load %arg3[%c0_3, %c0_4] : memref<1x96xf32, #tpu.memory_space<vmem>>, vector<1x96xf32>
    %4 = vector.broadcast %3 : vector<1x96xf32> to vector<32x96xf32>
    %5 = arith.addf %2, %4 : vector<32x96xf32>
    %c0_5 = arith.constant 0 : index
    %c0_6 = arith.constant 0 : index
    %6 = vector.load %arg4[%c0_5, %c0_6] : memref<32x8xf32, #tpu.memory_space<vmem>>, vector<32x8xf32>
    %cst_7 = arith.constant dense<0.000000e+00> : vector<32x8xf32>
    %7 = tpu.matmul %0, %6, %cst_7 {dimension_numbers = #tpu.dot_dimension_numbers<[1], [0], [0], [1], [0, 0, 1, 1], [], []>} : vector<32x32xf32>, vector<32x8xf32>, vector<32x8xf32> -> vector<32x8xf32>
    %c0_8 = arith.constant 0 : index
    %c0_9 = arith.constant 0 : index
    %8 = vector.load %arg5[%c0_8, %c0_9] : memref<1x8xf32, #tpu.memory_space<vmem>>, vector<1x8xf32>
    %9 = vector.broadcast %8 : vector<1x8xf32> to vector<32x8xf32>
    %10 = arith.addf %7, %9 : vector<32x8xf32>
    %11 = arith.negf %10 : vector<32x8xf32>
    %12 = math.exp %11 : vector<32x8xf32>
    %cst_10 = arith.constant 1.000000e+00 : f32
    %13 = vector.broadcast %cst_10 : f32 to vector<32x8xf32>
    %14 = arith.addf %13, %12 : vector<32x8xf32>
    %15 = arith.divf %13, %14 : vector<32x8xf32>
    %16 = vector.extract_strided_slice %15 {offsets = [0, 0], sizes = [32, 4], strides = [1, 1]} : vector<32x8xf32> to vector<32x4xf32>
    %17 = vector.extract_strided_slice %15 {offsets = [0, 4], sizes = [32, 4], strides = [1, 1]} : vector<32x8xf32> to vector<32x4xf32>
    %c0_11 = arith.constant 0 : index
    %c0_12 = arith.constant 0 : index
    %18 = vector.load %arg6[%c0_11, %c0_12] : memref<1x4xf32, #tpu.memory_space<vmem>>, vector<1x4xf32>
    %19 = vector.broadcast %18 : vector<1x4xf32> to vector<32x4xf32>
    %20 = arith.mulf %17, %19 : vector<32x4xf32>
    %cst_13 = arith.constant 1.000000e+00 : f32
    %21 = vector.broadcast %cst_13 : f32 to vector<32x4xf32>
    %22 = arith.subf %20, %21 : vector<32x4xf32>
    %23 = arith.mulf %16, %22 : vector<32x4xf32>
    %cst_14 = arith.constant 2.000000e+00 : f32
    %24 = vector.broadcast %cst_14 : f32 to vector<32x4xf32>
    %25 = arith.addf %23, %24 : vector<32x4xf32>
    %c0_15 = arith.constant 0 : index
    %c0_16 = arith.constant 0 : index
    %c0_17 = arith.constant 0 : index
    %26 = vector.load %arg1[%c0_15, %c0_16, %c0_17] : memref<4x16x16xf32, #tpu.memory_space<vmem>>, vector<1x16x16xf32>
    %27 = vector.shape_cast %26 : vector<1x16x16xf32> to vector<16x16xf32>
    %28 = vector.extract_strided_slice %25 {offsets = [0, 0], sizes = [32, 1], strides = [1, 1]} : vector<32x4xf32> to vector<32x1xf32>
    %29 = vector.extract_strided_slice %5 {offsets = [0, 0], sizes = [32, 8], strides = [1, 1]} : vector<32x96xf32> to vector<32x8xf32>
    %30 = vector.extract_strided_slice %5 {offsets = [0, 32], sizes = [32, 8], strides = [1, 1]} : vector<32x96xf32> to vector<32x8xf32>
    %31 = vector.extract_strided_slice %5 {offsets = [0, 64], sizes = [32, 8], strides = [1, 1]} : vector<32x96xf32> to vector<32x8xf32>
    %32 = vector.extract_strided_slice %29 {offsets = [0, 0], sizes = [16, 8], strides = [1, 1]} : vector<32x8xf32> to vector<16x8xf32>
    %33 = vector.extract_strided_slice %30 {offsets = [0, 0], sizes = [16, 8], strides = [1, 1]} : vector<32x8xf32> to vector<16x8xf32>
    %34 = vector.extract_strided_slice %31 {offsets = [0, 0], sizes = [16, 8], strides = [1, 1]} : vector<32x8xf32> to vector<16x8xf32>
    %35 = vector.extract_strided_slice %28 {offsets = [0, 0], sizes = [16, 1], strides = [1, 1]} : vector<32x1xf32> to vector<16x1xf32>
    %36 = vector.broadcast %35 : vector<16x1xf32> to vector<16x16xf32>
    %37 = arith.mulf %36, %27 : vector<16x16xf32>
    %cst_18 = arith.constant dense<0.000000e+00> : vector<16x16xf32>
    %38 = tpu.matmul %32, %33, %cst_18 {dimension_numbers = #tpu.dot_dimension_numbers<[1], [1], [0], [0], [0, 0, 1, 0], [], []>} : vector<16x8xf32>, vector<16x8xf32>, vector<16x16xf32> -> vector<16x16xf32>
    %cst_19 = arith.constant 0.353553385 : f32
    %39 = vector.broadcast %cst_19 : f32 to vector<16x16xf32>
    %40 = arith.mulf %38, %39 : vector<16x16xf32>
    %41 = arith.addf %40, %37 : vector<16x16xf32>
    %cst_20 = arith.constant dense<0xFF800000> : vector<16xf32>
    %42 = vector.multi_reduction <maximumf>, %41, %cst_20 [1] : vector<16x16xf32> to vector<16xf32>
    %43 = vector.shape_cast %42 : vector<16xf32> to vector<16x1xf32>
    %44 = vector.broadcast %43 : vector<16x1xf32> to vector<16x16xf32>
    %45 = arith.subf %41, %44 : vector<16x16xf32>
    %46 = math.exp %45 : vector<16x16xf32>
    %cst_21 = arith.constant dense<0.000000e+00> : vector<16xf32>
    %47 = vector.multi_reduction <add>, %46, %cst_21 [1] : vector<16x16xf32> to vector<16xf32>
    %48 = vector.shape_cast %47 : vector<16xf32> to vector<16x1xf32>
    %49 = tpu.reciprocal %48 {approx = true} : vector<16x1xf32> -> vector<16x1xf32>
    %50 = vector.broadcast %49 : vector<16x1xf32> to vector<16x16xf32>
    %51 = arith.mulf %46, %50 : vector<16x16xf32>
    %cst_22 = arith.constant dense<0.000000e+00> : vector<16x8xf32>
    %52 = tpu.matmul %51, %34, %cst_22 {dimension_numbers = #tpu.dot_dimension_numbers<[1], [0], [0], [1], [0, 0, 1, 1], [], []>} : vector<16x16xf32>, vector<16x8xf32>, vector<16x8xf32> -> vector<16x8xf32>
    %c0_23 = arith.constant 0 : index
    %c0_24 = arith.constant 0 : index
    %53 = vector.load %arg10[%c0_23, %c0_24] : memref<32x32xf32, #tpu.memory_space<vmem>>, vector<16x8xf32>
    tpu.vector_store %arg10[%c0_23, %c0_24], %52 {strides = array<i32>} : memref<32x32xf32, #tpu.memory_space<vmem>>, vector<16x8xf32>,
    %54 = vector.extract_strided_slice %29 {offsets = [16, 0], sizes = [16, 8], strides = [1, 1]} : vector<32x8xf32> to vector<16x8xf32>
    %55 = vector.extract_strided_slice %30 {offsets = [16, 0], sizes = [16, 8], strides = [1, 1]} : vector<32x8xf32> to vector<16x8xf32>
    %56 = vector.extract_strided_slice %31 {offsets = [16, 0], sizes = [16, 8], strides = [1, 1]} : vector<32x8xf32> to vector<16x8xf32>
    %57 = vector.extract_strided_slice %28 {offsets = [16, 0], sizes = [16, 1], strides = [1, 1]} : vector<32x1xf32> to vector<16x1xf32>
    %58 = vector.broadcast %57 : vector<16x1xf32> to vector<16x16xf32>
    %59 = arith.mulf %58, %27 : vector<16x16xf32>
    %cst_25 = arith.constant dense<0.000000e+00> : vector<16x16xf32>
    %60 = tpu.matmul %54, %55, %cst_25 {dimension_numbers = #tpu.dot_dimension_numbers<[1], [1], [0], [0], [0, 0, 1, 0], [], []>} : vector<16x8xf32>, vector<16x8xf32>, vector<16x16xf32> -> vector<16x16xf32>
    %cst_26 = arith.constant 0.353553385 : f32
    %61 = vector.broadcast %cst_26 : f32 to vector<16x16xf32>
    %62 = arith.mulf %60, %61 : vector<16x16xf32>
    %63 = arith.addf %62, %59 : vector<16x16xf32>
    %cst_27 = arith.constant dense<0xFF800000> : vector<16xf32>
    %64 = vector.multi_reduction <maximumf>, %63, %cst_27 [1] : vector<16x16xf32> to vector<16xf32>
    %65 = vector.shape_cast %64 : vector<16xf32> to vector<16x1xf32>
    %66 = vector.broadcast %65 : vector<16x1xf32> to vector<16x16xf32>
    %67 = arith.subf %63, %66 : vector<16x16xf32>
    %68 = math.exp %67 : vector<16x16xf32>
    %cst_28 = arith.constant dense<0.000000e+00> : vector<16xf32>
    %69 = vector.multi_reduction <add>, %68, %cst_28 [1] : vector<16x16xf32> to vector<16xf32>
    %70 = vector.shape_cast %69 : vector<16xf32> to vector<16x1xf32>
    %71 = tpu.reciprocal %70 {approx = true} : vector<16x1xf32> -> vector<16x1xf32>
    %72 = vector.broadcast %71 : vector<16x1xf32> to vector<16x16xf32>
    %73 = arith.mulf %68, %72 : vector<16x16xf32>
    %cst_29 = arith.constant dense<0.000000e+00> : vector<16x8xf32>
    %74 = tpu.matmul %73, %56, %cst_29 {dimension_numbers = #tpu.dot_dimension_numbers<[1], [0], [0], [1], [0, 0, 1, 1], [], []>} : vector<16x16xf32>, vector<16x8xf32>, vector<16x8xf32> -> vector<16x8xf32>
    %c16 = arith.constant 16 : index
    %c0_30 = arith.constant 0 : index
    %75 = vector.load %arg10[%c16, %c0_30] : memref<32x32xf32, #tpu.memory_space<vmem>>, vector<16x8xf32>
    tpu.vector_store %arg10[%c16, %c0_30], %74 {strides = array<i32>} : memref<32x32xf32, #tpu.memory_space<vmem>>, vector<16x8xf32>,
    %c1 = arith.constant 1 : index
    %c0_31 = arith.constant 0 : index
    %c0_32 = arith.constant 0 : index
    %76 = vector.load %arg1[%c1, %c0_31, %c0_32] : memref<4x16x16xf32, #tpu.memory_space<vmem>>, vector<1x16x16xf32>
    %77 = vector.shape_cast %76 : vector<1x16x16xf32> to vector<16x16xf32>
    %78 = vector.extract_strided_slice %25 {offsets = [0, 1], sizes = [32, 1], strides = [1, 1]} : vector<32x4xf32> to vector<32x1xf32>
    %79 = vector.extract_strided_slice %5 {offsets = [0, 8], sizes = [32, 8], strides = [1, 1]} : vector<32x96xf32> to vector<32x8xf32>
    %80 = vector.extract_strided_slice %5 {offsets = [0, 40], sizes = [32, 8], strides = [1, 1]} : vector<32x96xf32> to vector<32x8xf32>
    %81 = vector.extract_strided_slice %5 {offsets = [0, 72], sizes = [32, 8], strides = [1, 1]} : vector<32x96xf32> to vector<32x8xf32>
    %82 = vector.extract_strided_slice %79 {offsets = [0, 0], sizes = [16, 8], strides = [1, 1]} : vector<32x8xf32> to vector<16x8xf32>
    %83 = vector.extract_strided_slice %80 {offsets = [0, 0], sizes = [16, 8], strides = [1, 1]} : vector<32x8xf32> to vector<16x8xf32>
    %84 = vector.extract_strided_slice %81 {offsets = [0, 0], sizes = [16, 8], strides = [1, 1]} : vector<32x8xf32> to vector<16x8xf32>
    %85 = vector.extract_strided_slice %78 {offsets = [0, 0], sizes = [16, 1], strides = [1, 1]} : vector<32x1xf32> to vector<16x1xf32>
    %86 = vector.broadcast %85 : vector<16x1xf32> to vector<16x16xf32>
    %87 = arith.mulf %86, %77 : vector<16x16xf32>
    %cst_33 = arith.constant dense<0.000000e+00> : vector<16x16xf32>
    %88 = tpu.matmul %82, %83, %cst_33 {dimension_numbers = #tpu.dot_dimension_numbers<[1], [1], [0], [0], [0, 0, 1, 0], [], []>} : vector<16x8xf32>, vector<16x8xf32>, vector<16x16xf32> -> vector<16x16xf32>
    %cst_34 = arith.constant 0.353553385 : f32
    %89 = vector.broadcast %cst_34 : f32 to vector<16x16xf32>
    %90 = arith.mulf %88, %89 : vector<16x16xf32>
    %91 = arith.addf %90, %87 : vector<16x16xf32>
    %cst_35 = arith.constant dense<0xFF800000> : vector<16xf32>
    %92 = vector.multi_reduction <maximumf>, %91, %cst_35 [1] : vector<16x16xf32> to vector<16xf32>
    %93 = vector.shape_cast %92 : vector<16xf32> to vector<16x1xf32>
    %94 = vector.broadcast %93 : vector<16x1xf32> to vector<16x16xf32>
    %95 = arith.subf %91, %94 : vector<16x16xf32>
    %96 = math.exp %95 : vector<16x16xf32>
    %cst_36 = arith.constant dense<0.000000e+00> : vector<16xf32>
    %97 = vector.multi_reduction <add>, %96, %cst_36 [1] : vector<16x16xf32> to vector<16xf32>
    %98 = vector.shape_cast %97 : vector<16xf32> to vector<16x1xf32>
    %99 = tpu.reciprocal %98 {approx = true} : vector<16x1xf32> -> vector<16x1xf32>
    %100 = vector.broadcast %99 : vector<16x1xf32> to vector<16x16xf32>
    %101 = arith.mulf %96, %100 : vector<16x16xf32>
    %cst_37 = arith.constant dense<0.000000e+00> : vector<16x8xf32>
    %102 = tpu.matmul %101, %84, %cst_37 {dimension_numbers = #tpu.dot_dimension_numbers<[1], [0], [0], [1], [0, 0, 1, 1], [], []>} : vector<16x16xf32>, vector<16x8xf32>, vector<16x8xf32> -> vector<16x8xf32>
    %c0_38 = arith.constant 0 : index
    %c8 = arith.constant 8 : index
    %103 = vector.load %arg10[%c0_38, %c8] : memref<32x32xf32, #tpu.memory_space<vmem>>, vector<16x8xf32>
    tpu.vector_store %arg10[%c0_38, %c8], %102 {strides = array<i32>} : memref<32x32xf32, #tpu.memory_space<vmem>>, vector<16x8xf32>,
    %104 = vector.extract_strided_slice %79 {offsets = [16, 0], sizes = [16, 8], strides = [1, 1]} : vector<32x8xf32> to vector<16x8xf32>
    %105 = vector.extract_strided_slice %80 {offsets = [16, 0], sizes = [16, 8], strides = [1, 1]} : vector<32x8xf32> to vector<16x8xf32>
    %106 = vector.extract_strided_slice %81 {offsets = [16, 0], sizes = [16, 8], strides = [1, 1]} : vector<32x8xf32> to vector<16x8xf32>
    %107 = vector.extract_strided_slice %78 {offsets = [16, 0], sizes = [16, 1], strides = [1, 1]} : vector<32x1xf32> to vector<16x1xf32>
    %108 = vector.broadcast %107 : vector<16x1xf32> to vector<16x16xf32>
    %109 = arith.mulf %108, %77 : vector<16x16xf32>
    %cst_39 = arith.constant dense<0.000000e+00> : vector<16x16xf32>
    %110 = tpu.matmul %104, %105, %cst_39 {dimension_numbers = #tpu.dot_dimension_numbers<[1], [1], [0], [0], [0, 0, 1, 0], [], []>} : vector<16x8xf32>, vector<16x8xf32>, vector<16x16xf32> -> vector<16x16xf32>
    %cst_40 = arith.constant 0.353553385 : f32
    %111 = vector.broadcast %cst_40 : f32 to vector<16x16xf32>
    %112 = arith.mulf %110, %111 : vector<16x16xf32>
    %113 = arith.addf %112, %109 : vector<16x16xf32>
    %cst_41 = arith.constant dense<0xFF800000> : vector<16xf32>
    %114 = vector.multi_reduction <maximumf>, %113, %cst_41 [1] : vector<16x16xf32> to vector<16xf32>
    %115 = vector.shape_cast %114 : vector<16xf32> to vector<16x1xf32>
    %116 = vector.broadcast %115 : vector<16x1xf32> to vector<16x16xf32>
    %117 = arith.subf %113, %116 : vector<16x16xf32>
    %118 = math.exp %117 : vector<16x16xf32>
    %cst_42 = arith.constant dense<0.000000e+00> : vector<16xf32>
    %119 = vector.multi_reduction <add>, %118, %cst_42 [1] : vector<16x16xf32> to vector<16xf32>
    %120 = vector.shape_cast %119 : vector<16xf32> to vector<16x1xf32>
    %121 = tpu.reciprocal %120 {approx = true} : vector<16x1xf32> -> vector<16x1xf32>
    %122 = vector.broadcast %121 : vector<16x1xf32> to vector<16x16xf32>
    %123 = arith.mulf %118, %122 : vector<16x16xf32>
    %cst_43 = arith.constant dense<0.000000e+00> : vector<16x8xf32>
    %124 = tpu.matmul %123, %106, %cst_43 {dimension_numbers = #tpu.dot_dimension_numbers<[1], [0], [0], [1], [0, 0, 1, 1], [], []>} : vector<16x16xf32>, vector<16x8xf32>, vector<16x8xf32> -> vector<16x8xf32>
    %c16_44 = arith.constant 16 : index
    %c8_45 = arith.constant 8 : index
    %125 = vector.load %arg10[%c16_44, %c8_45] : memref<32x32xf32, #tpu.memory_space<vmem>>, vector<16x8xf32>
    tpu.vector_store %arg10[%c16_44, %c8_45], %124 {strides = array<i32>} : memref<32x32xf32, #tpu.memory_space<vmem>>, vector<16x8xf32>,
    %c2 = arith.constant 2 : index
    %c0_46 = arith.constant 0 : index
    %c0_47 = arith.constant 0 : index
    %126 = vector.load %arg1[%c2, %c0_46, %c0_47] : memref<4x16x16xf32, #tpu.memory_space<vmem>>, vector<1x16x16xf32>
    %127 = vector.shape_cast %126 : vector<1x16x16xf32> to vector<16x16xf32>
    %128 = vector.extract_strided_slice %25 {offsets = [0, 2], sizes = [32, 1], strides = [1, 1]} : vector<32x4xf32> to vector<32x1xf32>
    %129 = vector.extract_strided_slice %5 {offsets = [0, 16], sizes = [32, 8], strides = [1, 1]} : vector<32x96xf32> to vector<32x8xf32>
    %130 = vector.extract_strided_slice %5 {offsets = [0, 48], sizes = [32, 8], strides = [1, 1]} : vector<32x96xf32> to vector<32x8xf32>
    %131 = vector.extract_strided_slice %5 {offsets = [0, 80], sizes = [32, 8], strides = [1, 1]} : vector<32x96xf32> to vector<32x8xf32>
    %132 = vector.extract_strided_slice %129 {offsets = [0, 0], sizes = [16, 8], strides = [1, 1]} : vector<32x8xf32> to vector<16x8xf32>
    %133 = vector.extract_strided_slice %130 {offsets = [0, 0], sizes = [16, 8], strides = [1, 1]} : vector<32x8xf32> to vector<16x8xf32>
    %134 = vector.extract_strided_slice %131 {offsets = [0, 0], sizes = [16, 8], strides = [1, 1]} : vector<32x8xf32> to vector<16x8xf32>
    %135 = vector.extract_strided_slice %128 {offsets = [0, 0], sizes = [16, 1], strides = [1, 1]} : vector<32x1xf32> to vector<16x1xf32>
    %136 = vector.broadcast %135 : vector<16x1xf32> to vector<16x16xf32>
    %137 = arith.mulf %136, %127 : vector<16x16xf32>
    %cst_48 = arith.constant dense<0.000000e+00> : vector<16x16xf32>
    %138 = tpu.matmul %132, %133, %cst_48 {dimension_numbers = #tpu.dot_dimension_numbers<[1], [1], [0], [0], [0, 0, 1, 0], [], []>} : vector<16x8xf32>, vector<16x8xf32>, vector<16x16xf32> -> vector<16x16xf32>
    %cst_49 = arith.constant 0.353553385 : f32
    %139 = vector.broadcast %cst_49 : f32 to vector<16x16xf32>
    %140 = arith.mulf %138, %139 : vector<16x16xf32>
    %141 = arith.addf %140, %137 : vector<16x16xf32>
    %cst_50 = arith.constant dense<0xFF800000> : vector<16xf32>
    %142 = vector.multi_reduction <maximumf>, %141, %cst_50 [1] : vector<16x16xf32> to vector<16xf32>
    %143 = vector.shape_cast %142 : vector<16xf32> to vector<16x1xf32>
    %144 = vector.broadcast %143 : vector<16x1xf32> to vector<16x16xf32>
    %145 = arith.subf %141, %144 : vector<16x16xf32>
    %146 = math.exp %145 : vector<16x16xf32>
    %cst_51 = arith.constant dense<0.000000e+00> : vector<16xf32>
    %147 = vector.multi_reduction <add>, %146, %cst_51 [1] : vector<16x16xf32> to vector<16xf32>
    %148 = vector.shape_cast %147 : vector<16xf32> to vector<16x1xf32>
    %149 = tpu.reciprocal %148 {approx = true} : vector<16x1xf32> -> vector<16x1xf32>
    %150 = vector.broadcast %149 : vector<16x1xf32> to vector<16x16xf32>
    %151 = arith.mulf %146, %150 : vector<16x16xf32>
    %cst_52 = arith.constant dense<0.000000e+00> : vector<16x8xf32>
    %152 = tpu.matmul %151, %134, %cst_52 {dimension_numbers = #tpu.dot_dimension_numbers<[1], [0], [0], [1], [0, 0, 1, 1], [], []>} : vector<16x16xf32>, vector<16x8xf32>, vector<16x8xf32> -> vector<16x8xf32>
    %c0_53 = arith.constant 0 : index
    %c16_54 = arith.constant 16 : index
    %153 = vector.load %arg10[%c0_53, %c16_54] : memref<32x32xf32, #tpu.memory_space<vmem>>, vector<16x8xf32>
    tpu.vector_store %arg10[%c0_53, %c16_54], %152 {strides = array<i32>} : memref<32x32xf32, #tpu.memory_space<vmem>>, vector<16x8xf32>,
    %154 = vector.extract_strided_slice %129 {offsets = [16, 0], sizes = [16, 8], strides = [1, 1]} : vector<32x8xf32> to vector<16x8xf32>
    %155 = vector.extract_strided_slice %130 {offsets = [16, 0], sizes = [16, 8], strides = [1, 1]} : vector<32x8xf32> to vector<16x8xf32>
    %156 = vector.extract_strided_slice %131 {offsets = [16, 0], sizes = [16, 8], strides = [1, 1]} : vector<32x8xf32> to vector<16x8xf32>
    %157 = vector.extract_strided_slice %128 {offsets = [16, 0], sizes = [16, 1], strides = [1, 1]} : vector<32x1xf32> to vector<16x1xf32>
    %158 = vector.broadcast %157 : vector<16x1xf32> to vector<16x16xf32>
    %159 = arith.mulf %158, %127 : vector<16x16xf32>
    %cst_55 = arith.constant dense<0.000000e+00> : vector<16x16xf32>
    %160 = tpu.matmul %154, %155, %cst_55 {dimension_numbers = #tpu.dot_dimension_numbers<[1], [1], [0], [0], [0, 0, 1, 0], [], []>} : vector<16x8xf32>, vector<16x8xf32>, vector<16x16xf32> -> vector<16x16xf32>
    %cst_56 = arith.constant 0.353553385 : f32
    %161 = vector.broadcast %cst_56 : f32 to vector<16x16xf32>
    %162 = arith.mulf %160, %161 : vector<16x16xf32>
    %163 = arith.addf %162, %159 : vector<16x16xf32>
    %cst_57 = arith.constant dense<0xFF800000> : vector<16xf32>
    %164 = vector.multi_reduction <maximumf>, %163, %cst_57 [1] : vector<16x16xf32> to vector<16xf32>
    %165 = vector.shape_cast %164 : vector<16xf32> to vector<16x1xf32>
    %166 = vector.broadcast %165 : vector<16x1xf32> to vector<16x16xf32>
    %167 = arith.subf %163, %166 : vector<16x16xf32>
    %168 = math.exp %167 : vector<16x16xf32>
    %cst_58 = arith.constant dense<0.000000e+00> : vector<16xf32>
    %169 = vector.multi_reduction <add>, %168, %cst_58 [1] : vector<16x16xf32> to vector<16xf32>
    %170 = vector.shape_cast %169 : vector<16xf32> to vector<16x1xf32>
    %171 = tpu.reciprocal %170 {approx = true} : vector<16x1xf32> -> vector<16x1xf32>
    %172 = vector.broadcast %171 : vector<16x1xf32> to vector<16x16xf32>
    %173 = arith.mulf %168, %172 : vector<16x16xf32>
    %cst_59 = arith.constant dense<0.000000e+00> : vector<16x8xf32>
    %174 = tpu.matmul %173, %156, %cst_59 {dimension_numbers = #tpu.dot_dimension_numbers<[1], [0], [0], [1], [0, 0, 1, 1], [], []>} : vector<16x16xf32>, vector<16x8xf32>, vector<16x8xf32> -> vector<16x8xf32>
    %c16_60 = arith.constant 16 : index
    %c16_61 = arith.constant 16 : index
    %175 = vector.load %arg10[%c16_60, %c16_61] : memref<32x32xf32, #tpu.memory_space<vmem>>, vector<16x8xf32>
    tpu.vector_store %arg10[%c16_60, %c16_61], %174 {strides = array<i32>} : memref<32x32xf32, #tpu.memory_space<vmem>>, vector<16x8xf32>,
    %c3 = arith.constant 3 : index
    %c0_62 = arith.constant 0 : index
    %c0_63 = arith.constant 0 : index
    %176 = vector.load %arg1[%c3, %c0_62, %c0_63] : memref<4x16x16xf32, #tpu.memory_space<vmem>>, vector<1x16x16xf32>
    %177 = vector.shape_cast %176 : vector<1x16x16xf32> to vector<16x16xf32>
    %178 = vector.extract_strided_slice %25 {offsets = [0, 3], sizes = [32, 1], strides = [1, 1]} : vector<32x4xf32> to vector<32x1xf32>
    %179 = vector.extract_strided_slice %5 {offsets = [0, 24], sizes = [32, 8], strides = [1, 1]} : vector<32x96xf32> to vector<32x8xf32>
    %180 = vector.extract_strided_slice %5 {offsets = [0, 56], sizes = [32, 8], strides = [1, 1]} : vector<32x96xf32> to vector<32x8xf32>
    %181 = vector.extract_strided_slice %5 {offsets = [0, 88], sizes = [32, 8], strides = [1, 1]} : vector<32x96xf32> to vector<32x8xf32>
    %182 = vector.extract_strided_slice %179 {offsets = [0, 0], sizes = [16, 8], strides = [1, 1]} : vector<32x8xf32> to vector<16x8xf32>
    %183 = vector.extract_strided_slice %180 {offsets = [0, 0], sizes = [16, 8], strides = [1, 1]} : vector<32x8xf32> to vector<16x8xf32>
    %184 = vector.extract_strided_slice %181 {offsets = [0, 0], sizes = [16, 8], strides = [1, 1]} : vector<32x8xf32> to vector<16x8xf32>
    %185 = vector.extract_strided_slice %178 {offsets = [0, 0], sizes = [16, 1], strides = [1, 1]} : vector<32x1xf32> to vector<16x1xf32>
    %186 = vector.broadcast %185 : vector<16x1xf32> to vector<16x16xf32>
    %187 = arith.mulf %186, %177 : vector<16x16xf32>
    %cst_64 = arith.constant dense<0.000000e+00> : vector<16x16xf32>
    %188 = tpu.matmul %182, %183, %cst_64 {dimension_numbers = #tpu.dot_dimension_numbers<[1], [1], [0], [0], [0, 0, 1, 0], [], []>} : vector<16x8xf32>, vector<16x8xf32>, vector<16x16xf32> -> vector<16x16xf32>
    %cst_65 = arith.constant 0.353553385 : f32
    %189 = vector.broadcast %cst_65 : f32 to vector<16x16xf32>
    %190 = arith.mulf %188, %189 : vector<16x16xf32>
    %191 = arith.addf %190, %187 : vector<16x16xf32>
    %cst_66 = arith.constant dense<0xFF800000> : vector<16xf32>
    %192 = vector.multi_reduction <maximumf>, %191, %cst_66 [1] : vector<16x16xf32> to vector<16xf32>
    %193 = vector.shape_cast %192 : vector<16xf32> to vector<16x1xf32>
    %194 = vector.broadcast %193 : vector<16x1xf32> to vector<16x16xf32>
    %195 = arith.subf %191, %194 : vector<16x16xf32>
    %196 = math.exp %195 : vector<16x16xf32>
    %cst_67 = arith.constant dense<0.000000e+00> : vector<16xf32>
    %197 = vector.multi_reduction <add>, %196, %cst_67 [1] : vector<16x16xf32> to vector<16xf32>
    %198 = vector.shape_cast %197 : vector<16xf32> to vector<16x1xf32>
    %199 = tpu.reciprocal %198 {approx = true} : vector<16x1xf32> -> vector<16x1xf32>
    %200 = vector.broadcast %199 : vector<16x1xf32> to vector<16x16xf32>
    %201 = arith.mulf %196, %200 : vector<16x16xf32>
    %cst_68 = arith.constant dense<0.000000e+00> : vector<16x8xf32>
    %202 = tpu.matmul %201, %184, %cst_68 {dimension_numbers = #tpu.dot_dimension_numbers<[1], [0], [0], [1], [0, 0, 1, 1], [], []>} : vector<16x16xf32>, vector<16x8xf32>, vector<16x8xf32> -> vector<16x8xf32>
    %c0_69 = arith.constant 0 : index
    %c24 = arith.constant 24 : index
    %203 = vector.load %arg10[%c0_69, %c24] : memref<32x32xf32, #tpu.memory_space<vmem>>, vector<16x8xf32>
    tpu.vector_store %arg10[%c0_69, %c24], %202 {strides = array<i32>} : memref<32x32xf32, #tpu.memory_space<vmem>>, vector<16x8xf32>,
    %204 = vector.extract_strided_slice %179 {offsets = [16, 0], sizes = [16, 8], strides = [1, 1]} : vector<32x8xf32> to vector<16x8xf32>
    %205 = vector.extract_strided_slice %180 {offsets = [16, 0], sizes = [16, 8], strides = [1, 1]} : vector<32x8xf32> to vector<16x8xf32>
    %206 = vector.extract_strided_slice %181 {offsets = [16, 0], sizes = [16, 8], strides = [1, 1]} : vector<32x8xf32> to vector<16x8xf32>
    %207 = vector.extract_strided_slice %178 {offsets = [16, 0], sizes = [16, 1], strides = [1, 1]} : vector<32x1xf32> to vector<16x1xf32>
    %208 = vector.broadcast %207 : vector<16x1xf32> to vector<16x16xf32>
    %209 = arith.mulf %208, %177 : vector<16x16xf32>
    %cst_70 = arith.constant dense<0.000000e+00> : vector<16x16xf32>
    %210 = tpu.matmul %204, %205, %cst_70 {dimension_numbers = #tpu.dot_dimension_numbers<[1], [1], [0], [0], [0, 0, 1, 0], [], []>} : vector<16x8xf32>, vector<16x8xf32>, vector<16x16xf32> -> vector<16x16xf32>
    %cst_71 = arith.constant 0.353553385 : f32
    %211 = vector.broadcast %cst_71 : f32 to vector<16x16xf32>
    %212 = arith.mulf %210, %211 : vector<16x16xf32>
    %213 = arith.addf %212, %209 : vector<16x16xf32>
    %cst_72 = arith.constant dense<0xFF800000> : vector<16xf32>
    %214 = vector.multi_reduction <maximumf>, %213, %cst_72 [1] : vector<16x16xf32> to vector<16xf32>
    %215 = vector.shape_cast %214 : vector<16xf32> to vector<16x1xf32>
    %216 = vector.broadcast %215 : vector<16x1xf32> to vector<16x16xf32>
    %217 = arith.subf %213, %216 : vector<16x16xf32>
    %218 = math.exp %217 : vector<16x16xf32>
    %cst_73 = arith.constant dense<0.000000e+00> : vector<16xf32>
    %219 = vector.multi_reduction <add>, %218, %cst_73 [1] : vector<16x16xf32> to vector<16xf32>
    %220 = vector.shape_cast %219 : vector<16xf32> to vector<16x1xf32>
    %221 = tpu.reciprocal %220 {approx = true} : vector<16x1xf32> -> vector<16x1xf32>
    %222 = vector.broadcast %221 : vector<16x1xf32> to vector<16x16xf32>
    %223 = arith.mulf %218, %222 : vector<16x16xf32>
    %cst_74 = arith.constant dense<0.000000e+00> : vector<16x8xf32>
    %224 = tpu.matmul %223, %206, %cst_74 {dimension_numbers = #tpu.dot_dimension_numbers<[1], [0], [0], [1], [0, 0, 1, 1], [], []>} : vector<16x16xf32>, vector<16x8xf32>, vector<16x8xf32> -> vector<16x8xf32>
    %c16_75 = arith.constant 16 : index
    %c24_76 = arith.constant 24 : index
    %225 = vector.load %arg10[%c16_75, %c24_76] : memref<32x32xf32, #tpu.memory_space<vmem>>, vector<16x8xf32>
    tpu.vector_store %arg10[%c16_75, %c24_76], %224 {strides = array<i32>} : memref<32x32xf32, #tpu.memory_space<vmem>>, vector<16x8xf32>,
    %c0_77 = arith.constant 0 : index
    %c0_78 = arith.constant 0 : index
    %226 = vector.load %arg10[%c0_77, %c0_78] : memref<32x32xf32, #tpu.memory_space<vmem>>, vector<32x32xf32>
    %c0_79 = arith.constant 0 : index
    %c0_80 = arith.constant 0 : index
    %227 = vector.load %arg7[%c0_79, %c0_80] : memref<32x32xf32, #tpu.memory_space<vmem>>, vector<32x32xf32>
    %cst_81 = arith.constant dense<0.000000e+00> : vector<32x32xf32>
    %228 = tpu.matmul %226, %227, %cst_81 {dimension_numbers = #tpu.dot_dimension_numbers<[1], [0], [0], [1], [0, 0, 1, 1], [], []>} : vector<32x32xf32>, vector<32x32xf32>, vector<32x32xf32> -> vector<32x32xf32>
    %c0_82 = arith.constant 0 : index
    %c0_83 = arith.constant 0 : index
    %229 = vector.load %arg8[%c0_82, %c0_83] : memref<1x32xf32, #tpu.memory_space<vmem>>, vector<1x32xf32>
    %230 = vector.broadcast %229 : vector<1x32xf32> to vector<32x32xf32>
    %231 = arith.addf %228, %230 : vector<32x32xf32>
    %c0_84 = arith.constant 0 : index
    %c0_85 = arith.constant 0 : index
    %232 = vector.load %arg9[%c0_84, %c0_85] : memref<32x32xf32, #tpu.memory_space<vmem>>, vector<32x32xf32>
    tpu.vector_store %arg9[%c0_84, %c0_85], %231 {strides = array<i32>} : memref<32x32xf32, #tpu.memory_space<vmem>>, vector<32x32xf32>,
    return
  }
}

</mosaic_0001>

<llo_original>
// kernel: tpu_custom_call.1
$region0: #{tpu_custom_call.1}
  #allocation0 [shape = 'u32[]', space=smem, size = 0x4, offset = 0x4, fixed_abs, tag = 'smem constant byte address 0x4 - core index']
  #allocation1 [shape = 'u32[144,128]{1,0:T(1,128)}', space=vmem, size = 0x12000, scoped, tag = 'internal scratch']
  #allocation2 [shape = 'f32[32,32]{1,0:T(8,128)}', space=vmem, size = 0x4000, scoped, tag = 'scratch operand']
  %s0 = inlined_call_operand.vmem [shape: f32[32,32], index: 0, kind: input, shape index: {}]
  %s1 = inlined_call_operand.hbm [shape: f32[4,16,16], index: 1, kind: input, shape index: {}]
  %s2 = inlined_call_operand.hbm [shape: f32[32,96], index: 2, kind: input, shape index: {}]
  %s3 = inlined_call_operand.vmem [shape: f32[1,96], index: 3, kind: input, shape index: {}]
  %s4 = inlined_call_operand.vmem [shape: f32[32,8], index: 4, kind: input, shape index: {}]
  %s5 = inlined_call_operand.vmem [shape: f32[1,8], index: 5, kind: input, shape index: {}]
  %s6 = inlined_call_operand.hbm [shape: f32[1,4], index: 6, kind: input, shape index: {}]
  %s7 = inlined_call_operand.vmem [shape: f32[32,32], index: 7, kind: input, shape index: {}]
  %s8 = inlined_call_operand.vmem [shape: f32[1,32], index: 8, kind: input, shape index: {}]
  %s9 = inlined_call_operand.hbm [shape: f32[32,32], index: 9, kind: output, shape index: {}]
  %s10 = sld [smem:[#allocation0]]
  $region58: #{tpu_custom_call.1} parent=0
    _
  %s12 = ssub.s32 1, %s10
  %s13 = scalar_select 0, %s12, %s10
  $region1: #{tpu_custom_call.1} parent=0
    #allocation3 [shape = 'u8[32768]{0}', space=vmem, size = 0x8000, scoped, tag = 'input window, operand 1, single buffered']
    #allocation4 [shape = 's32[1]{0}', space=sflag, size = 0x4, scoped, tag = 'scoped memory for tpu_custom_call.1']
    #allocation5 [shape = 's32[1]{0}', space=sflag, size = 0x4, scoped, tag = 'scoped memory for tpu_custom_call.1']
    #allocation6 [shape = 'u8[16384]{0}', space=vmem, size = 0x4000, scoped, tag = 'input window, operand 2, single buffered']
    #allocation7 [shape = 's32[1]{0}', space=sflag, size = 0x4, scoped, tag = 'scoped memory for tpu_custom_call.1']
    #allocation8 [shape = 'u8[512]{0}', space=vmem, size = 0x400, scoped, tag = 'input window, operand 6, single buffered']
    #allocation9 [shape = 'u8[16384]{0}', space=vmem, size = 0x4000, scoped, tag = 'output window, operand 0, single buffered']
    %14 = vsyncpa [#allocation4], 0
    %15 = vsyncpa [#allocation7], 0
    %16 = vsyncpa [#allocation5], 0
    // Predicated region
    $region2: #{tpu_custom_call.1} parent=1 // pred_check
      _
    $region3: #{tpu_custom_call.1} parent=1 // pred_check_branch
      %18 = sbr.rel (0) target = $region5
    $region4: #{tpu_custom_call.1} parent=1 // pred_region
      _
    $region5: #{tpu_custom_call.1} parent=1 // pred_fallthru
      _
    // Predicated region
    $region6: #{tpu_custom_call.1} parent=1 // pred_check
      _
    $region7: #{tpu_custom_call.1} parent=1 // pred_check_branch
      %20 = sbr.rel (0) target = $region9
    $region8: #{tpu_custom_call.1} parent=1 // pred_region
      %s22 = ssub.s32 1024, 1024
      %23 = vsyncadd [#allocation4], %s22
      %s24 = sshll.u32 [#allocation3], 4
      %s25 = int_to_ptr.vmem [resolvable:$true] %s24
      %30 = dma.hbm_to_vmem [thread:$0]  %s1, 1024, %s25, [#allocation4], 128, 128, 8
    $region9: #{tpu_custom_call.1} parent=1 // pred_fallthru
      _
    // Predicated region
    $region10: #{tpu_custom_call.1} parent=1 // pred_check
      _
    $region11: #{tpu_custom_call.1} parent=1 // pred_check_branch
      %32 = sbr.rel (0) target = $region13
    $region12: #{tpu_custom_call.1} parent=1 // pred_region
      %s34 = ssub.s32 512, 512
      %35 = vsyncadd [#allocation7], %s34
      %s36 = sshll.u32 [#allocation6], 4
      %s37 = int_to_ptr.vmem [resolvable:$true] %s36
      %42 = dma.hbm_to_vmem [thread:$0]  %s2, 512, %s37, [#allocation7], 128, 128, 8
    $region13: #{tpu_custom_call.1} parent=1 // pred_fallthru
      _
    // Predicated region
    $region14: #{tpu_custom_call.1} parent=1 // pred_check
      _
    $region15: #{tpu_custom_call.1} parent=1 // pred_check_branch
      %44 = sbr.rel (0) target = $region17
    $region16: #{tpu_custom_call.1} parent=1 // pred_region
      _
    $region17: #{tpu_custom_call.1} parent=1 // pred_fallthru
      _
    // Predicated region
    $region18: #{tpu_custom_call.1} parent=1 // pred_check
      _
    $region19: #{tpu_custom_call.1} parent=1 // pred_check_branch
      %46 = sbr.rel (0) target = $region21
    $region20: #{tpu_custom_call.1} parent=1 // pred_region
      _
    $region21: #{tpu_custom_call.1} parent=1 // pred_fallthru
      _
    // Predicated region
    $region22: #{tpu_custom_call.1} parent=1 // pred_check
      _
    $region23: #{tpu_custom_call.1} parent=1 // pred_check_branch
      %48 = sbr.rel (0) target = $region25
    $region24: #{tpu_custom_call.1} parent=1 // pred_region
      _
    $region25: #{tpu_custom_call.1} parent=1 // pred_fallthru
      _
    // Predicated region
    $region26: #{tpu_custom_call.1} parent=1 // pred_check
      _
    $region27: #{tpu_custom_call.1} parent=1 // pred_check_branch
      %50 = sbr.rel (0) target = $region29
    $region28: #{tpu_custom_call.1} parent=1 // pred_region
      %s52 = ssub.s32 16, 16
      %53 = vsyncadd [#allocation7], %s52
      %s55 = sshll.u32 [#allocation8], 4
      %s56 = int_to_ptr.vmem [resolvable:$true] %s55
      %58 = dma.hbm_to_vmem [thread:$0]  %s6, 16, %s56, [#allocation7]
    $region29: #{tpu_custom_call.1} parent=1 // pred_fallthru
      _
    // Predicated region
    $region30: #{tpu_custom_call.1} parent=1 // pred_check
      _
    $region31: #{tpu_custom_call.1} parent=1 // pred_check_branch
      %60 = sbr.rel (0) target = $region33
    $region32: #{tpu_custom_call.1} parent=1 // pred_region
      _
    $region33: #{tpu_custom_call.1} parent=1 // pred_fallthru
      _
    // Predicated region
    $region34: #{tpu_custom_call.1} parent=1 // pred_check
      _
    $region35: #{tpu_custom_call.1} parent=1 // pred_check_branch
      %62 = sbr.rel (0) target = $region37
    $region36: #{tpu_custom_call.1} parent=1 // pred_region
      _
    $region37: #{tpu_custom_call.1} parent=1 // pred_fallthru
      _
    // Predicated region
    $region38: #{tpu_custom_call.1} parent=1 // pred_check
      _
    $region39: #{tpu_custom_call.1} parent=1 // pred_check_branch
      %64 = sbr.rel (0) target = $region41
    $region40: #{tpu_custom_call.1} parent=1 // pred_region
      %65 = dma.done [#allocation4], 1024
    $region41: #{tpu_custom_call.1} parent=1 // pred_fallthru
      _
    // Predicated region
    $region42: #{tpu_custom_call.1} parent=1 // pred_check
      _
    $region43: #{tpu_custom_call.1} parent=1 // pred_check_branch
      %67 = sbr.rel (0) target = $region45
    $region44: #{tpu_custom_call.1} parent=1 // pred_region
      %68 = dma.done [#allocation7], 512
    $region45: #{tpu_custom_call.1} parent=1 // pred_fallthru
      _
    // Predicated region
    $region46: #{tpu_custom_call.1} parent=1 // pred_check
      _
    $region47: #{tpu_custom_call.1} parent=1 // pred_check_branch
      %70 = sbr.rel (0) target = $region49
    $region48: #{tpu_custom_call.1} parent=1 // pred_region
      %71 = dma.done [#allocation7], 16
    $region49: #{tpu_custom_call.1} parent=1 // pred_fallthru
      _
    %v72 = vld [vmem:[%s0] sm:$0xff]
    %v73 = vld [vmem:[%s0 + $0x8] sm:$0xff]
    %v74 = vld [vmem:[%s0 + $0x10] sm:$0xff]
    %v75 = vld [vmem:[%s0 + $0x18] sm:$0xff]
    %v76 = vld [vmem:[#allocation6] sm:$0xff]
    %v77 = vld [vmem:[#allocation6 + $0x8] sm:$0xff]
    %v78 = vld [vmem:[#allocation6 + $0x10] sm:$0xff]
    %v79 = vld [vmem:[#allocation6 + $0x18] sm:$0xff]
    %v80 = vld [vmem:[%s3] sm:$0x1]
    %v82 = vlaneseq
    %v83 = vshrl.u32 %v82, 7
    %v84 = vsub.s32 0, %v83
    %v85 = vrot.slane %v80, %v84
    %vm87 = vcmask 261120
    %v89 = vsel %vm87, %v72, 0
    %v92 = vsel %vm87, %v73, 0
    %v95 = vsel %vm87, %v74, 0
    %v98 = vsel %vm87, %v75, 0
    %100 = vmatprep.subr.mxu0 0.0
    %101 = vmatpush1.msra.mxu0 %v76
    %102 = vmatprep.subr.mxu0 0.0
    %103 = vmatpush1.msra.mxu0 %v77
    %104 = vmatprep.subr.mxu0 0.0
    %105 = vmatpush1.msra.mxu0 %v78
    %106 = vmatprep.subr.mxu0 0.0
    %107 = vmatpush1.msra.mxu0 %v79
    %108 = vmatprep.subr.mxu0 0.0
    %109 = vmatpush1.msra.mxu0 0.0
    %110 = vmatprep.subr.mxu0 0.0
    %111 = vmatpush1.msra.mxu0 0.0
    %112 = vmatprep.subr.mxu0 0.0
    %113 = vmatpush1.msra.mxu0 0.0
    %114 = vmatprep.subr.mxu0 0.0
    %115 = vmatpush1.msra.mxu0 0.0
    %116 = vmatprep.subr.mxu0 0.0
    %117 = vmatpush1.msra.mxu0 0.0
    %118 = vmatprep.subr.mxu0 0.0
    %119 = vmatpush1.msra.mxu0 0.0
    %120 = vmatprep.subr.mxu0 0.0
    %121 = vmatpush1.msra.mxu0 0.0
    %122 = vmatprep.subr.mxu0 0.0
    %123 = vmatpush1.msra.mxu0 0.0
    %124 = vmatprep.subr.mxu0 0.0
    %125 = vmatpush1.msra.mxu0 0.0
    %126 = vmatprep.subr.mxu0 0.0
    %127 = vmatpush1.msra.mxu0 0.0
    %128 = vmatprep.subr.mxu0 0.0
    %129 = vmatpush1.msra.mxu0 0.0
    %130 = vmatprep.subr.mxu0 0.0
    %131 = vmatpush1.msra.mxu0 0.0
    %132 = vmatprep.subr.mxu0 0.0
    %133 = vmatpush1.msra.mxu0 0.0
    %134 = vmatprep.subr.mxu0 0.0
    %135 = vmatpush1.msra.mxu0 0.0
    %136 = vmatprep.subr.mxu0 0.0
    %137 = vmatpush1.msra.mxu0 0.0
    %138 = vmatprep.subr.mxu0 0.0
    %139 = vmatpush1.msra.mxu0 0.0
    %140 = vmatprep.subr.mxu0 0.0
    %141 = vmatpush1.msra.mxu0 0.0
    %142 = vmatprep.subr.mxu0 0.0
    %143 = vmatpush1.msra.mxu0 0.0
    %144 = vmatprep.subr.mxu0 0.0
    %145 = vmatpush1.msra.mxu0 0.0
    %146 = vmatprep.subr.mxu0 0.0
    %147 = vmatpush1.msra.mxu0 0.0
    %148 = vmatprep.subr.mxu0 0.0
    %149 = vmatpush1.msra.mxu0 0.0
    %150 = vmatprep.subr.mxu0 0.0
    %151 = vmatpush1.msra.mxu0 0.0
    %152 = vmatprep.subr.mxu0 0.0
    %153 = vmatpush1.msra.mxu0 0.0
    %154 = vmatprep.subr.mxu0 0.0
    %155 = vmatpush1.msra.mxu0 0.0
    %156 = vmatprep.subr.mxu0 0.0
    %157 = vmatpush1.msra.mxu0 0.0
    %158 = vmatprep.subr.mxu0 0.0
    %159 = vmatpush1.msra.mxu0 0.0
    %160 = vmatprep.subr.mxu0 0.0
    %161 = vmatpush1.msra.mxu0 0.0
    %162 = vmatprep.subr.mxu0 0.0
    %163 = vmatpush1.msra.mxu0 0.0
    %164 = vmatprep.mubr.f32.mxu0 0.0
    %165 = vmatmul.mubr.f32.gmra.mrb[0].mxu0 %v89
    %v166 = vpop.f32.mrb[0].mxu0
    %v167 = vadd.f32 %v85, %v166
    %v168 = vpop.f32.mrb[0].mxu0
    %169 = vmatprep.mubr.f32.mxu0 0.0
    %170 = vmatmul.mubr.f32.gmra.mrb[0].mxu0 %v92
    %v171 = vpop.f32.mrb[0].mxu0
    %v172 = vadd.f32 %v85, %v171
    %v173 = vpop.f32.mrb[0].mxu0
    %174 = vmatprep.mubr.f32.mxu0 0.0
    %175 = vmatmul.mubr.f32.gmra.mrb[0].mxu0 %v95
    %v176 = vpop.f32.mrb[0].mxu0
    %v177 = vadd.f32 %v85, %v176
    %v178 = vpop.f32.mrb[0].mxu0
    %179 = vmatprep.mubr.f32.mxu0 0.0
    %180 = vmatmul.mubr.f32.gmra.mrb[0].mxu0 %v98
    %v181 = vpop.f32.mrb[0].mxu0
    %v182 = vadd.f32 %v85, %v181
    %v183 = vpop.f32.mrb[0].mxu0
    %184 = vdwg.mxu0
    %v185 = vld [vmem:[%s4] sm:$0xff]
    %v186 = vld [vmem:[%s4 + $0x8] sm:$0xff]
    %v187 = vld [vmem:[%s4 + $0x10] sm:$0xff]
    %v188 = vld [vmem:[%s4 + $0x18] sm:$0xff]
    %v189 = vld [vmem:[%s5] sm:$0x1]
    %v191 = vlaneseq
    %v192 = vshrl.u32 %v191, 7
    %v193 = vsub.s32 0, %v192
    %v194 = vrot.slane %v189, %v193
    %196 = vmatprep.subr.mxu0 0.0
    %197 = vmatpush1.msra.mxu0 %v185
    %198 = vmatprep.subr.mxu0 0.0
    %199 = vmatpush1.msra.mxu0 %v186
    %200 = vmatprep.subr.mxu0 0.0
    %201 = vmatpush1.msra.mxu0 %v187
    %202 = vmatprep.subr.mxu0 0.0
    %203 = vmatpush1.msra.mxu0 %v188
    %204 = vmatprep.subr.mxu0 0.0
    %205 = vmatpush1.msra.mxu0 0.0
    %206 = vmatprep.subr.mxu0 0.0
    %207 = vmatpush1.msra.mxu0 0.0
    %208 = vmatprep.subr.mxu0 0.0
    %209 = vmatpush1.msra.mxu0 0.0
    %210 = vmatprep.subr.mxu0 0.0
    %211 = vmatpush1.msra.mxu0 0.0
    %212 = vmatprep.subr.mxu0 0.0
    %213 = vmatpush1.msra.mxu0 0.0
    %214 = vmatprep.subr.mxu0 0.0
    %215 = vmatpush1.msra.mxu0 0.0
    %216 = vmatprep.subr.mxu0 0.0
    %217 = vmatpush1.msra.mxu0 0.0
    %218 = vmatprep.subr.mxu0 0.0
    %219 = vmatpush1.msra.mxu0 0.0
    %220 = vmatprep.subr.mxu0 0.0
    %221 = vmatpush1.msra.mxu0 0.0
    %222 = vmatprep.subr.mxu0 0.0
    %223 = vmatpush1.msra.mxu0 0.0
    %224 = vmatprep.subr.mxu0 0.0
    %225 = vmatpush1.msra.mxu0 0.0
    %226 = vmatprep.subr.mxu0 0.0
    %227 = vmatpush1.msra.mxu0 0.0
    %228 = vmatprep.subr.mxu0 0.0
    %229 = vmatpush1.msra.mxu0 0.0
    %230 = vmatprep.subr.mxu0 0.0
    %231 = vmatpush1.msra.mxu0 0.0
    %232 = vmatprep.subr.mxu0 0.0
    %233 = vmatpush1.msra.mxu0 0.0
    %234 = vmatprep.subr.mxu0 0.0
    %235 = vmatpush1.msra.mxu0 0.0
    %236 = vmatprep.subr.mxu0 0.0
    %237 = vmatpush1.msra.mxu0 0.0
    %238 = vmatprep.subr.mxu0 0.0
    %239 = vmatpush1.msra.mxu0 0.0
    %240 = vmatprep.subr.mxu0 0.0
    %241 = vmatpush1.msra.mxu0 0.0
    %242 = vmatprep.subr.mxu0 0.0
    %243 = vmatpush1.msra.mxu0 0.0
    %244 = vmatprep.subr.mxu0 0.0
    %245 = vmatpush1.msra.mxu0 0.0
    %246 = vmatprep.subr.mxu0 0.0
    %247 = vmatpush1.msra.mxu0 0.0
    %248 = vmatprep.subr.mxu0 0.0
    %249 = vmatpush1.msra.mxu0 0.0
    %250 = vmatprep.subr.mxu0 0.0
    %251 = vmatpush1.msra.mxu0 0.0
    %252 = vmatprep.subr.mxu0 0.0
    %253 = vmatpush1.msra.mxu0 0.0
    %254 = vmatprep.subr.mxu0 0.0
    %255 = vmatpush1.msra.mxu0 0.0
    %256 = vmatprep.subr.mxu0 0.0
    %257 = vmatpush1.msra.mxu0 0.0
    %258 = vmatprep.subr.mxu0 0.0
    %259 = vmatpush1.msra.mxu0 0.0
    %260 = vmatprep.mubr.f32.mxu0 0.0
    %261 = vmatmul.mubr.f32.gmra.mrb[0].mxu0 %v89
    %v262 = vpop.f32.mrb[0].mxu0
    %v263 = vadd.f32 %v194, %v262
    %v264 = vpop.f32.mrb[0].mxu0
    %265 = vmatprep.mubr.f32.mxu0 0.0
    %266 = vmatmul.mubr.f32.gmra.mrb[0].mxu0 %v92
    %v267 = vpop.f32.mrb[0].mxu0
    %v268 = vadd.f32 %v194, %v267
    %v269 = vpop.f32.mrb[0].mxu0
    %270 = vmatprep.mubr.f32.mxu0 0.0
    %271 = vmatmul.mubr.f32.gmra.mrb[0].mxu0 %v95
    %v272 = vpop.f32.mrb[0].mxu0
    %v273 = vadd.f32 %v194, %v272
    %v274 = vpop.f32.mrb[0].mxu0
    %275 = vmatprep.mubr.f32.mxu0 0.0
    %276 = vmatmul.mubr.f32.gmra.mrb[0].mxu0 %v98
    %v277 = vpop.f32.mrb[0].mxu0
    %v278 = vadd.f32 %v194, %v277
    %v279 = vpop.f32.mrb[0].mxu0
    %280 = vdwg.mxu0
    %v281 = vxor.u32 %v263, 2147483648
    %v282 = vxor.u32 %v268, 2147483648
    %v283 = vxor.u32 %v273, 2147483648
    %v284 = vxor.u32 %v278, 2147483648
    %v285 = vmul.f32 %v281, 1.442695
    %v286 = vpow.pop %v285
    %v287 = vmul.f32 %v282, 1.442695
    %v288 = vpow.pop %v287
    %v289 = vmul.f32 %v283, 1.442695
    %v290 = vpow.pop %v289
    %v291 = vmul.f32 %v284, 1.442695
    %v292 = vpow.pop %v291
    %v293 = vadd.f32 %v286, 1.0
    %v294 = vadd.f32 %v288, 1.0
    %v295 = vadd.f32 %v290, 1.0
    %v296 = vadd.f32 %v292, 1.0
    %v297 = vrcp.pop %v293
    %v298 = vmul.f32 1.0, %v297
    %v299 = vrcp.pop %v294
    %v300 = vmul.f32 1.0, %v299
    %v301 = vrcp.pop %v295
    %v302 = vmul.f32 1.0, %v301
    %v303 = vrcp.pop %v296
    %v304 = vmul.f32 1.0, %v303
    %v305 = vld [vmem:[#allocation8] sm:$0x1]
    %v307 = vlaneseq
    %v308 = vshrl.u32 %v307, 7
    %v309 = vsub.s32 0, %v308
    %v310 = vrot.slane %v305, %v309
    %311 = vrot.lane.b32.xlu0 %v310, 4
    %v312 = vpop.permute.xlu0 %311
    %v314 = vmul.f32 %v298, %v312
    %v315 = vmul.f32 %v300, %v312
    %v316 = vmul.f32 %v302, %v312
    %v317 = vmul.f32 %v304, %v312
    %v318 = vsub.f32 %v314, 1.0
    %v319 = vsub.f32 %v315, 1.0
    %v320 = vsub.f32 %v316, 1.0
    %v321 = vsub.f32 %v317, 1.0
    %326 = vrot.lane.b32.xlu0 %v318, 124
    %v327 = vpop.permute.xlu0 %326
    %328 = vrot.lane.b32.xlu0 %v319, 124
    %v329 = vpop.permute.xlu0 %328
    %330 = vrot.lane.b32.xlu0 %v320, 124
    %v331 = vpop.permute.xlu0 %330
    %332 = vrot.lane.b32.xlu0 %v321, 124
    %v333 = vpop.permute.xlu0 %332
    %v338 = vmul.f32 %v298, %v327
    %v339 = vmul.f32 %v300, %v329
    %v340 = vmul.f32 %v302, %v331
    %v341 = vmul.f32 %v304, %v333
    %v342 = vadd.f32 %v338, 2.0
    %v343 = vadd.f32 %v339, 2.0
    %v344 = vadd.f32 %v340, 2.0
    %v345 = vadd.f32 %v341, 2.0
    %v346 = vld [vmem:[#allocation3] sm:$0xff]
    %v347 = vld [vmem:[#allocation3 + $0x8] sm:$0xff]
    %349 = vset.pattern.permute.xlu0 0
    %350 = vperm.xlu0 %349, %v342
    %v351 = vpop.permute.xlu0 %350
    %354 = vset.pattern.permute.xlu0 0
    %355 = vperm.xlu0 %354, %v343
    %v356 = vpop.permute.xlu0 %355
    %v358 = vmul.f32 %v351, %v346
    %v359 = vmul.f32 %v356, %v347
    %362 = vrot.lane.b32.xlu0 %v167, 96
    %v363 = vpop.permute.xlu0 %362
    %364 = vrot.lane.b32.xlu0 %v172, 96
    %v365 = vpop.permute.xlu0 %364
    %vm366 = vcmask 64512
    %v367 = vsel %vm366, %v167, 0
    %v369 = vsel %vm366, %v172, 0
    %v371 = vsel %vm366, %v363, 0
    %v373 = vsel %vm366, %v365, 0
    %375 = vmatprep.subr.mxu0 0.0
    %376 = vmatpush1.xpose.msra.mxu0 %v371
    %377 = vmatprep.subr.mxu0 0.0
    %378 = vmatpush1.xpose.msra.mxu0 %v373
    %379 = vmatprep.subr.mxu0 0.0
    %380 = vmatpush1.xpose.msra.mxu0 0.0
    %381 = vmatprep.subr.mxu0 0.0
    %382 = vmatpush1.xpose.msra.mxu0 0.0
    %383 = vmatprep.subr.mxu0 0.0
    %384 = vmatpush1.xpose.msra.mxu0 0.0
    %385 = vmatprep.subr.mxu0 0.0
    %386 = vmatpush1.xpose.msra.mxu0 0.0
    %387 = vmatprep.subr.mxu0 0.0
    %388 = vmatpush1.xpose.msra.mxu0 0.0
    %389 = vmatprep.subr.mxu0 0.0
    %390 = vmatpush1.xpose.msra.mxu0 0.0
    %391 = vmatprep.subr.mxu0 0.0
    %392 = vmatpush1.xpose.msra.mxu0 0.0
    %393 = vmatprep.subr.mxu0 0.0
    %394 = vmatpush1.xpose.msra.mxu0 0.0
    %395 = vmatprep.subr.mxu0 0.0
    %396 = vmatpush1.xpose.msra.mxu0 0.0
    %397 = vmatprep.subr.mxu0 0.0
    %398 = vmatpush1.xpose.msra.mxu0 0.0
    %399 = vmatprep.subr.mxu0 0.0
    %400 = vmatpush1.xpose.msra.mxu0 0.0
    %401 = vmatprep.subr.mxu0 0.0
    %402 = vmatpush1.xpose.msra.mxu0 0.0
    %403 = vmatprep.subr.mxu0 0.0
    %404 = vmatpush1.xpose.msra.mxu0 0.0
    %405 = vmatprep.subr.mxu0 0.0
    %406 = vmatpush1.xpose.msra.mxu0 0.0
    %407 = vmatprep.subr.mxu0 0.0
    %408 = vmatpush1.xpose.msra.mxu0 0.0
    %409 = vmatprep.subr.mxu0 0.0
    %410 = vmatpush1.xpose.msra.mxu0 0.0
    %411 = vmatprep.subr.mxu0 0.0
    %412 = vmatpush1.xpose.msra.mxu0 0.0
    %413 = vmatprep.subr.mxu0 0.0
    %414 = vmatpush1.xpose.msra.mxu0 0.0
    %415 = vmatprep.subr.mxu0 0.0
    %416 = vmatpush1.xpose.msra.mxu0 0.0
    %417 = vmatprep.subr.mxu0 0.0
    %418 = vmatpush1.xpose.msra.mxu0 0.0
    %419 = vmatprep.subr.mxu0 0.0
    %420 = vmatpush1.xpose.msra.mxu0 0.0
    %421 = vmatprep.subr.mxu0 0.0
    %422 = vmatpush1.xpose.msra.mxu0 0.0
    %423 = vmatprep.subr.mxu0 0.0
    %424 = vmatpush1.xpose.msra.mxu0 0.0
    %425 = vmatprep.subr.mxu0 0.0
    %426 = vmatpush1.xpose.msra.mxu0 0.0
    %427 = vmatprep.subr.mxu0 0.0
    %428 = vmatpush1.xpose.msra.mxu0 0.0
    %429 = vmatprep.subr.mxu0 0.0
    %430 = vmatpush1.xpose.msra.mxu0 0.0
    %431 = vmatprep.subr.mxu0 0.0
    %432 = vmatpush1.xpose.msra.mxu0 0.0
    %433 = vmatprep.subr.mxu0 0.0
    %434 = vmatpush1.xpose.msra.mxu0 0.0
    %435 = vmatprep.subr.mxu0 0.0
    %436 = vmatpush1.xpose.msra.mxu0 0.0
    %437 = vmatprep.subr.mxu0 0.0
    %438 = vmatpush1.xpose.msra.mxu0 0.0
    %439 = vmatprep.mubr.f32.mxu0 0.0
    %440 = vmatmul.mubr.f32.gmra.mrb[0].mxu0 %v367
    %v441 = vpop.f32.mrb[0].mxu0
    %v442 = vadd.f32 0.0, %v441
    %v443 = vpop.f32.mrb[0].mxu0
    %444 = vmatprep.mubr.f32.mxu0 0.0
    %445 = vmatmul.mubr.f32.gmra.mrb[0].mxu0 %v369
    %v446 = vpop.f32.mrb[0].mxu0
    %v447 = vadd.f32 0.0, %v446
    %v448 = vpop.f32.mrb[0].mxu0
    %449 = vdwg.mxu0
    %v450 = vmul.f32 %v442, 0.35355338
    %v451 = vmul.f32 %v447, 0.35355338
    %v452 = vadd.f32 %v450, %v358
    %v453 = vadd.f32 %v451, %v359
    %vm454 = vcmask 130048
    %v455 = vsel %vm454, %v452, -inf
    %456 = vmax.xlane.f32.xlu0 %v455
    %v457 = vpop.xlane.xlu0 %456
    %v458 = vsel %vm454, %v453, -inf
    %459 = vmax.xlane.f32.xlu0 %v458
    %v460 = vpop.xlane.xlu0 %459
    %v461 = vsub.f32 %v452, %v457
    %v462 = vsub.f32 %v453, %v460
    %v463 = vmul.f32 %v461, 1.442695
    %v464 = vpow.pop %v463
    %v465 = vmul.f32 %v462, 1.442695
    %v466 = vpow.pop %v465
    %v467 = vsel %vm454, %v464, 0.0
    %468 = vadd.xlane.f32.xlu0 %v467
    %v469 = vpop.xlane.xlu0 %468
    %v470 = vsel %vm454, %v466, 0.0
    %471 = vadd.xlane.f32.xlu0 %v470
    %v472 = vpop.xlane.xlu0 %471
    %v473 = vrcp.pop %v469
    %v474 = vrcp.pop %v472
    %v475 = vmul.f32 %v464, %v473
    %v476 = vmul.f32 %v466, %v474
    %477 = vrot.lane.b32.xlu0 %v167, 64
    %v478 = vpop.permute.xlu0 %477
    %479 = vrot.lane.b32.xlu0 %v172, 64
    %v480 = vpop.permute.xlu0 %479
    %v484 = vsel %vm454, %v475, 0
    %v487 = vsel %vm454, %v476, 0
    %489 = vmatprep.subr.mxu0 0.0
    %490 = vmatpush1.msra.mxu0 %v478
    %491 = vmatprep.subr.mxu0 0.0
    %492 = vmatpush1.msra.mxu0 %v480
    %493 = vmatprep.subr.mxu0 0.0
    %494 = vmatpush1.msra.mxu0 0.0
    %495 = vmatprep.subr.mxu0 0.0
    %496 = vmatpush1.msra.mxu0 0.0
    %497 = vmatprep.subr.mxu0 0.0
    %498 = vmatpush1.msra.mxu0 0.0
    %499 = vmatprep.subr.mxu0 0.0
    %500 = vmatpush1.msra.mxu0 0.0
    %501 = vmatprep.subr.mxu0 0.0
    %502 = vmatpush1.msra.mxu0 0.0
    %503 = vmatprep.subr.mxu0 0.0
    %504 = vmatpush1.msra.mxu0 0.0
    %505 = vmatprep.subr.mxu0 0.0
    %506 = vmatpush1.msra.mxu0 0.0
    %507 = vmatprep.subr.mxu0 0.0
    %508 = vmatpush1.msra.mxu0 0.0
    %509 = vmatprep.subr.mxu0 0.0
    %510 = vmatpush1.msra.mxu0 0.0
    %511 = vmatprep.subr.mxu0 0.0
    %512 = vmatpush1.msra.mxu0 0.0
    %513 = vmatprep.subr.mxu0 0.0
    %514 = vmatpush1.msra.mxu0 0.0
    %515 = vmatprep.subr.mxu0 0.0
    %516 = vmatpush1.msra.mxu0 0.0
    %517 = vmatprep.subr.mxu0 0.0
    %518 = vmatpush1.msra.mxu0 0.0
    %519 = vmatprep.subr.mxu0 0.0
    %520 = vmatpush1.msra.mxu0 0.0
    %521 = vmatprep.subr.mxu0 0.0
    %522 = vmatpush1.msra.mxu0 0.0
    %523 = vmatprep.subr.mxu0 0.0
    %524 = vmatpush1.msra.mxu0 0.0
    %525 = vmatprep.subr.mxu0 0.0
    %526 = vmatpush1.msra.mxu0 0.0
    %527 = vmatprep.subr.mxu0 0.0
    %528 = vmatpush1.msra.mxu0 0.0
    %529 = vmatprep.subr.mxu0 0.0
    %530 = vmatpush1.msra.mxu0 0.0
    %531 = vmatprep.subr.mxu0 0.0
    %532 = vmatpush1.msra.mxu0 0.0
    %533 = vmatprep.subr.mxu0 0.0
    %534 = vmatpush1.msra.mxu0 0.0
    %535 = vmatprep.subr.mxu0 0.0
    %536 = vmatpush1.msra.mxu0 0.0
    %537 = vmatprep.subr.mxu0 0.0
    %538 = vmatpush1.msra.mxu0 0.0
    %539 = vmatprep.subr.mxu0 0.0
    %540 = vmatpush1.msra.mxu0 0.0
    %541 = vmatprep.subr.mxu0 0.0
    %542 = vmatpush1.msra.mxu0 0.0
    %543 = vmatprep.subr.mxu0 0.0
    %544 = vmatpush1.msra.mxu0 0.0
    %545 = vmatprep.subr.mxu0 0.0
    %546 = vmatpush1.msra.mxu0 0.0
    %547 = vmatprep.subr.mxu0 0.0
    %548 = vmatpush1.msra.mxu0 0.0
    %549 = vmatprep.subr.mxu0 0.0
    %550 = vmatpush1.msra.mxu0 0.0
    %551 = vmatprep.subr.mxu0 0.0
    %552 = vmatpush1.msra.mxu0 0.0
    %553 = vmatprep.mubr.f32.mxu0 0.0
    %554 = vmatmul.mubr.f32.gmra.mrb[0].mxu0 %v484
    %v555 = vpop.f32.mrb[0].mxu0
    %v556 = vadd.f32 0.0, %v555
    %v557 = vpop.f32.mrb[0].mxu0
    %558 = vmatprep.mubr.f32.mxu0 0.0
    %559 = vmatmul.mubr.f32.gmra.mrb[0].mxu0 %v487
    %v560 = vpop.f32.mrb[0].mxu0
    %v561 = vadd.f32 0.0, %v560
    %v562 = vpop.f32.mrb[0].mxu0
    %563 = vdwg.mxu0
    %564 = vst.msk [vmem:[#allocation2] sm:$0xff] %vm366, %v556
    %565 = vst.msk [vmem:[#allocation2 + $0x8] sm:$0xff] %vm366, %v561
    %567 = vset.pattern.permute.xlu0 0
    %568 = vperm.xlu0 %567, %v344
    %v569 = vpop.permute.xlu0 %568
    %572 = vset.pattern.permute.xlu0 0
    %573 = vperm.xlu0 %572, %v345
    %v574 = vpop.permute.xlu0 %573
    %v576 = vmul.f32 %v569, %v346
    %v577 = vmul.f32 %v574, %v347
    %580 = vrot.lane.b32.xlu0 %v177, 96
    %v581 = vpop.permute.xlu0 %580
    %582 = vrot.lane.b32.xlu0 %v182, 96
    %v583 = vpop.permute.xlu0 %582
    %v584 = vsel %vm366, %v177, 0
    %v586 = vsel %vm366, %v182, 0
    %v588 = vsel %vm366, %v581, 0
    %v590 = vsel %vm366, %v583, 0
    %592 = vmatprep.subr.mxu0 0.0
    %593 = vmatpush1.xpose.msra.mxu0 %v588
    %594 = vmatprep.subr.mxu0 0.0
    %595 = vmatpush1.xpose.msra.mxu0 %v590
    %596 = vmatprep.subr.mxu0 0.0
    %597 = vmatpush1.xpose.msra.mxu0 0.0
    %598 = vmatprep.subr.mxu0 0.0
    %599 = vmatpush1.xpose.msra.mxu0 0.0
    %600 = vmatprep.subr.mxu0 0.0
    %601 = vmatpush1.xpose.msra.mxu0 0.0
    %602 = vmatprep.subr.mxu0 0.0
    %603 = vmatpush1.xpose.msra.mxu0 0.0
    %604 = vmatprep.subr.mxu0 0.0
    %605 = vmatpush1.xpose.msra.mxu0 0.0
    %606 = vmatprep.subr.mxu0 0.0
    %607 = vmatpush1.xpose.msra.mxu0 0.0
    %608 = vmatprep.subr.mxu0 0.0
    %609 = vmatpush1.xpose.msra.mxu0 0.0
    %610 = vmatprep.subr.mxu0 0.0
    %611 = vmatpush1.xpose.msra.mxu0 0.0
    %612 = vmatprep.subr.mxu0 0.0
    %613 = vmatpush1.xpose.msra.mxu0 0.0
    %614 = vmatprep.subr.mxu0 0.0
    %615 = vmatpush1.xpose.msra.mxu0 0.0
    %616 = vmatprep.subr.mxu0 0.0
    %617 = vmatpush1.xpose.msra.mxu0 0.0
    %618 = vmatprep.subr.mxu0 0.0
    %619 = vmatpush1.xpose.msra.mxu0 0.0
    %620 = vmatprep.subr.mxu0 0.0
    %621 = vmatpush1.xpose.msra.mxu0 0.0
    %622 = vmatprep.subr.mxu0 0.0
    %623 = vmatpush1.xpose.msra.mxu0 0.0
    %624 = vmatprep.subr.mxu0 0.0
    %625 = vmatpush1.xpose.msra.mxu0 0.0
    %626 = vmatprep.subr.mxu0 0.0
    %627 = vmatpush1.xpose.msra.mxu0 0.0
    %628 = vmatprep.subr.mxu0 0.0
    %629 = vmatpush1.xpose.msra.mxu0 0.0
    %630 = vmatprep.subr.mxu0 0.0
    %631 = vmatpush1.xpose.msra.mxu0 0.0
    %632 = vmatprep.subr.mxu0 0.0
    %633 = vmatpush1.xpose.msra.mxu0 0.0
    %634 = vmatprep.subr.mxu0 0.0
    %635 = vmatpush1.xpose.msra.mxu0 0.0
    %636 = vmatprep.subr.mxu0 0.0
    %637 = vmatpush1.xpose.msra.mxu0 0.0
    %638 = vmatprep.subr.mxu0 0.0
    %639 = vmatpush1.xpose.msra.mxu0 0.0
    %640 = vmatprep.subr.mxu0 0.0
    %641 = vmatpush1.xpose.msra.mxu0 0.0
    %642 = vmatprep.subr.mxu0 0.0
    %643 = vmatpush1.xpose.msra.mxu0 0.0
    %644 = vmatprep.subr.mxu0 0.0
    %645 = vmatpush1.xpose.msra.mxu0 0.0
    %646 = vmatprep.subr.mxu0 0.0
    %647 = vmatpush1.xpose.msra.mxu0 0.0
    %648 = vmatprep.subr.mxu0 0.0
    %649 = vmatpush1.xpose.msra.mxu0 0.0
    %650 = vmatprep.subr.mxu0 0.0
    %651 = vmatpush1.xpose.msra.mxu0 0.0
    %652 = vmatprep.subr.mxu0 0.0
    %653 = vmatpush1.xpose.msra.mxu0 0.0
    %654 = vmatprep.subr.mxu0 0.0
    %655 = vmatpush1.xpose.msra.mxu0 0.0
    %656 = vmatprep.mubr.f32.mxu0 0.0
    %657 = vmatmul.mubr.f32.gmra.mrb[0].mxu0 %v584
    %v658 = vpop.f32.mrb[0].mxu0
    %v659 = vadd.f32 0.0, %v658
    %v660 = vpop.f32.mrb[0].mxu0
    %661 = vmatprep.mubr.f32.mxu0 0.0
    %662 = vmatmul.mubr.f32.gmra.mrb[0].mxu0 %v586
    %v663 = vpop.f32.mrb[0].mxu0
    %v664 = vadd.f32 0.0, %v663
    %v665 = vpop.f32.mrb[0].mxu0
    %666 = vdwg.mxu0
    %v667 = vmul.f32 %v659, 0.35355338
    %v668 = vmul.f32 %v664, 0.35355338
    %v669 = vadd.f32 %v667, %v576
    %v670 = vadd.f32 %v668, %v577
    %v671 = vsel %vm454, %v669, -inf
    %672 = vmax.xlane.f32.xlu0 %v671
    %v673 = vpop.xlane.xlu0 %672
    %v674 = vsel %vm454, %v670, -inf
    %675 = vmax.xlane.f32.xlu0 %v674
    %v676 = vpop.xlane.xlu0 %675
    %v677 = vsub.f32 %v669, %v673
    %v678 = vsub.f32 %v670, %v676
    %v679 = vmul.f32 %v677, 1.442695
    %v680 = vpow.pop %v679
    %v681 = vmul.f32 %v678, 1.442695
    %v682 = vpow.pop %v681
    %v683 = vsel %vm454, %v680, 0.0
    %684 = vadd.xlane.f32.xlu0 %v683
    %v685 = vpop.xlane.xlu0 %684
    %v686 = vsel %vm454, %v682, 0.0
    %687 = vadd.xlane.f32.xlu0 %v686
    %v688 = vpop.xlane.xlu0 %687
    %v689 = vrcp.pop %v685
    %v690 = vrcp.pop %v688
    %v691 = vmul.f32 %v680, %v689
    %v692 = vmul.f32 %v682, %v690
    %693 = vrot.lane.b32.xlu0 %v177, 64
    %v694 = vpop.permute.xlu0 %693
    %695 = vrot.lane.b32.xlu0 %v182, 64
    %v696 = vpop.permute.xlu0 %695
    %v700 = vsel %vm454, %v691, 0
    %v703 = vsel %vm454, %v692, 0
    %705 = vmatprep.subr.mxu0 0.0
    %706 = vmatpush1.msra.mxu0 %v694
    %707 = vmatprep.subr.mxu0 0.0
    %708 = vmatpush1.msra.mxu0 %v696
    %709 = vmatprep.subr.mxu0 0.0
    %710 = vmatpush1.msra.mxu0 0.0
    %711 = vmatprep.subr.mxu0 0.0
    %712 = vmatpush1.msra.mxu0 0.0
    %713 = vmatprep.subr.mxu0 0.0
    %714 = vmatpush1.msra.mxu0 0.0
    %715 = vmatprep.subr.mxu0 0.0
    %716 = vmatpush1.msra.mxu0 0.0
    %717 = vmatprep.subr.mxu0 0.0
    %718 = vmatpush1.msra.mxu0 0.0
    %719 = vmatprep.subr.mxu0 0.0
    %720 = vmatpush1.msra.mxu0 0.0
    %721 = vmatprep.subr.mxu0 0.0
    %722 = vmatpush1.msra.mxu0 0.0
    %723 = vmatprep.subr.mxu0 0.0
    %724 = vmatpush1.msra.mxu0 0.0
    %725 = vmatprep.subr.mxu0 0.0
    %726 = vmatpush1.msra.mxu0 0.0
    %727 = vmatprep.subr.mxu0 0.0
    %728 = vmatpush1.msra.mxu0 0.0
    %729 = vmatprep.subr.mxu0 0.0
    %730 = vmatpush1.msra.mxu0 0.0
    %731 = vmatprep.subr.mxu0 0.0
    %732 = vmatpush1.msra.mxu0 0.0
    %733 = vmatprep.subr.mxu0 0.0
    %734 = vmatpush1.msra.mxu0 0.0
    %735 = vmatprep.subr.mxu0 0.0
    %736 = vmatpush1.msra.mxu0 0.0
    %737 = vmatprep.subr.mxu0 0.0
    %738 = vmatpush1.msra.mxu0 0.0
    %739 = vmatprep.subr.mxu0 0.0
    %740 = vmatpush1.msra.mxu0 0.0
    %741 = vmatprep.subr.mxu0 0.0
    %742 = vmatpush1.msra.mxu0 0.0
    %743 = vmatprep.subr.mxu0 0.0
    %744 = vmatpush1.msra.mxu0 0.0
    %745 = vmatprep.subr.mxu0 0.0
    %746 = vmatpush1.msra.mxu0 0.0
    %747 = vmatprep.subr.mxu0 0.0
    %748 = vmatpush1.msra.mxu0 0.0
    %749 = vmatprep.subr.mxu0 0.0
    %750 = vmatpush1.msra.mxu0 0.0
    %751 = vmatprep.subr.mxu0 0.0
    %752 = vmatpush1.msra.mxu0 0.0
    %753 = vmatprep.subr.mxu0 0.0
    %754 = vmatpush1.msra.mxu0 0.0
    %755 = vmatprep.subr.mxu0 0.0
    %756 = vmatpush1.msra.mxu0 0.0
    %757 = vmatprep.subr.mxu0 0.0
    %758 = vmatpush1.msra.mxu0 0.0
    %759 = vmatprep.subr.mxu0 0.0
    %760 = vmatpush1.msra.mxu0 0.0
    %761 = vmatprep.subr.mxu0 0.0
    %762 = vmatpush1.msra.mxu0 0.0
    %763 = vmatprep.subr.mxu0 0.0
    %764 = vmatpush1.msra.mxu0 0.0
    %765 = vmatprep.subr.mxu0 0.0
    %766 = vmatpush1.msra.mxu0 0.0
    %767 = vmatprep.subr.mxu0 0.0
    %768 = vmatpush1.msra.mxu0 0.0
    %769 = vmatprep.mubr.f32.mxu0 0.0
    %770 = vmatmul.mubr.f32.gmra.mrb[0].mxu0 %v700
    %v771 = vpop.f32.mrb[0].mxu0
    %v772 = vadd.f32 0.0, %v771
    %v773 = vpop.f32.mrb[0].mxu0
    %774 = vmatprep.mubr.f32.mxu0 0.0
    %775 = vmatmul.mubr.f32.gmra.mrb[0].mxu0 %v703
    %v776 = vpop.f32.mrb[0].mxu0
    %v777 = vadd.f32 0.0, %v776
    %v778 = vpop.f32.mrb[0].mxu0
    %779 = vdwg.mxu0
    %780 = vst.msk [vmem:[#allocation2 + $0x10] sm:$0xff] %vm366, %v772
    %781 = vst.msk [vmem:[#allocation2 + $0x18] sm:$0xff] %vm366, %v777
    %s782 = scalar_lea.vmem [#allocation3], 16
    %v783 = vld [vmem:[%s782] sm:$0xff]
    %v784 = vld [vmem:[%s782 + $0x8] sm:$0xff]
    %785 = vset.pattern.permute.xlu0 1
    %786 = vperm.xlu0 %785, %v342
    %v787 = vpop.permute.xlu0 %786
    %789 = vset.pattern.permute.xlu0 1
    %790 = vperm.xlu0 %789, %v343
    %v791 = vpop.permute.xlu0 %790
    %v793 = vmul.f32 %v787, %v783
    %v794 = vmul.f32 %v791, %v784
    %795 = vrot.lane.b32.xlu0 %v167, 120
    %v796 = vpop.permute.xlu0 %795
    %797 = vrot.lane.b32.xlu0 %v172, 120
    %v798 = vpop.permute.xlu0 %797
    %799 = vrot.lane.b32.xlu0 %v167, 88
    %v800 = vpop.permute.xlu0 %799
    %801 = vrot.lane.b32.xlu0 %v172, 88
    %v802 = vpop.permute.xlu0 %801
    %v803 = vsel %vm366, %v796, 0
    %v805 = vsel %vm366, %v798, 0
    %v807 = vsel %vm366, %v800, 0
    %v809 = vsel %vm366, %v802, 0
    %811 = vmatprep.subr.mxu0 0.0
    %812 = vmatpush1.xpose.msra.mxu0 %v807
    %813 = vmatprep.subr.mxu0 0.0
    %814 = vmatpush1.xpose.msra.mxu0 %v809
    %815 = vmatprep.subr.mxu0 0.0
    %816 = vmatpush1.xpose.msra.mxu0 0.0
    %817 = vmatprep.subr.mxu0 0.0
    %818 = vmatpush1.xpose.msra.mxu0 0.0
    %819 = vmatprep.subr.mxu0 0.0
    %820 = vmatpush1.xpose.msra.mxu0 0.0
    %821 = vmatprep.subr.mxu0 0.0
    %822 = vmatpush1.xpose.msra.mxu0 0.0
    %823 = vmatprep.subr.mxu0 0.0
    %824 = vmatpush1.xpose.msra.mxu0 0.0
    %825 = vmatprep.subr.mxu0 0.0
    %826 = vmatpush1.xpose.msra.mxu0 0.0
    %827 = vmatprep.subr.mxu0 0.0
    %828 = vmatpush1.xpose.msra.mxu0 0.0
    %829 = vmatprep.subr.mxu0 0.0
    %830 = vmatpush1.xpose.msra.mxu0 0.0
    %831 = vmatprep.subr.mxu0 0.0
    %832 = vmatpush1.xpose.msra.mxu0 0.0
    %833 = vmatprep.subr.mxu0 0.0
    %834 = vmatpush1.xpose.msra.mxu0 0.0
    %835 = vmatprep.subr.mxu0 0.0
    %836 = vmatpush1.xpose.msra.mxu0 0.0
    %837 = vmatprep.subr.mxu0 0.0
    %838 = vmatpush1.xpose.msra.mxu0 0.0
    %839 = vmatprep.subr.mxu0 0.0
    %840 = vmatpush1.xpose.msra.mxu0 0.0
    %841 = vmatprep.subr.mxu0 0.0
    %842 = vmatpush1.xpose.msra.mxu0 0.0
    %843 = vmatprep.subr.mxu0 0.0
    %844 = vmatpush1.xpose.msra.mxu0 0.0
    %845 = vmatprep.subr.mxu0 0.0
    %846 = vmatpush1.xpose.msra.mxu0 0.0
    %847 = vmatprep.subr.mxu0 0.0
    %848 = vmatpush1.xpose.msra.mxu0 0.0
    %849 = vmatprep.subr.mxu0 0.0
    %850 = vmatpush1.xpose.msra.mxu0 0.0
    %851 = vmatprep.subr.mxu0 0.0
    %852 = vmatpush1.xpose.msra.mxu0 0.0
    %853 = vmatprep.subr.mxu0 0.0
    %854 = vmatpush1.xpose.msra.mxu0 0.0
    %855 = vmatprep.subr.mxu0 0.0
    %856 = vmatpush1.xpose.msra.mxu0 0.0
    %857 = vmatprep.subr.mxu0 0.0
    %858 = vmatpush1.xpose.msra.mxu0 0.0
    %859 = vmatprep.subr.mxu0 0.0
    %860 = vmatpush1.xpose.msra.mxu0 0.0
    %861 = vmatprep.subr.mxu0 0.0
    %862 = vmatpush1.xpose.msra.mxu0 0.0
    %863 = vmatprep.subr.mxu0 0.0
    %864 = vmatpush1.xpose.msra.mxu0 0.0
    %865 = vmatprep.subr.mxu0 0.0
    %866 = vmatpush1.xpose.msra.mxu0 0.0
    %867 = vmatprep.subr.mxu0 0.0
    %868 = vmatpush1.xpose.msra.mxu0 0.0
    %869 = vmatprep.subr.mxu0 0.0
    %870 = vmatpush1.xpose.msra.mxu0 0.0
    %871 = vmatprep.subr.mxu0 0.0
    %872 = vmatpush1.xpose.msra.mxu0 0.0
    %873 = vmatprep.subr.mxu0 0.0
    %874 = vmatpush1.xpose.msra.mxu0 0.0
    %875 = vmatprep.mubr.f32.mxu0 0.0
    %876 = vmatmul.mubr.f32.gmra.mrb[0].mxu0 %v803
    %v877 = vpop.f32.mrb[0].mxu0
    %v878 = vadd.f32 0.0, %v877
    %v879 = vpop.f32.mrb[0].mxu0
    %880 = vmatprep.mubr.f32.mxu0 0.0
    %881 = vmatmul.mubr.f32.gmra.mrb[0].mxu0 %v805
    %v882 = vpop.f32.mrb[0].mxu0
    %v883 = vadd.f32 0.0, %v882
    %v884 = vpop.f32.mrb[0].mxu0
    %885 = vdwg.mxu0
    %v886 = vmul.f32 %v878, 0.35355338
    %v887 = vmul.f32 %v883, 0.35355338
    %v888 = vadd.f32 %v886, %v793
    %v889 = vadd.f32 %v887, %v794
    %v890 = vsel %vm454, %v888, -inf
    %891 = vmax.xlane.f32.xlu0 %v890
    %v892 = vpop.xlane.xlu0 %891
    %v893 = vsel %vm454, %v889, -inf
    %894 = vmax.xlane.f32.xlu0 %v893
    %v895 = vpop.xlane.xlu0 %894
    %v896 = vsub.f32 %v888, %v892
    %v897 = vsub.f32 %v889, %v895
    %v898 = vmul.f32 %v896, 1.442695
    %v899 = vpow.pop %v898
    %v900 = vmul.f32 %v897, 1.442695
    %v901 = vpow.pop %v900
    %v902 = vsel %vm454, %v899, 0.0
    %903 = vadd.xlane.f32.xlu0 %v902
    %v904 = vpop.xlane.xlu0 %903
    %v905 = vsel %vm454, %v901, 0.0
    %906 = vadd.xlane.f32.xlu0 %v905
    %v907 = vpop.xlane.xlu0 %906
    %v908 = vrcp.pop %v904
    %v909 = vrcp.pop %v907
    %v910 = vmul.f32 %v899, %v908
    %v911 = vmul.f32 %v901, %v909
    %912 = vrot.lane.b32.xlu0 %v167, 56
    %v913 = vpop.permute.xlu0 %912
    %914 = vrot.lane.b32.xlu0 %v172, 56
    %v915 = vpop.permute.xlu0 %914
    %v919 = vsel %vm454, %v910, 0
    %v922 = vsel %vm454, %v911, 0
    %924 = vmatprep.subr.mxu0 0.0
    %925 = vmatpush1.msra.mxu0 %v913
    %926 = vmatprep.subr.mxu0 0.0
    %927 = vmatpush1.msra.mxu0 %v915
    %928 = vmatprep.subr.mxu0 0.0
    %929 = vmatpush1.msra.mxu0 0.0
    %930 = vmatprep.subr.mxu0 0.0
    %931 = vmatpush1.msra.mxu0 0.0
    %932 = vmatprep.subr.mxu0 0.0
    %933 = vmatpush1.msra.mxu0 0.0
    %934 = vmatprep.subr.mxu0 0.0
    %935 = vmatpush1.msra.mxu0 0.0
    %936 = vmatprep.subr.mxu0 0.0
    %937 = vmatpush1.msra.mxu0 0.0
    %938 = vmatprep.subr.mxu0 0.0
    %939 = vmatpush1.msra.mxu0 0.0
    %940 = vmatprep.subr.mxu0 0.0
    %941 = vmatpush1.msra.mxu0 0.0
    %942 = vmatprep.subr.mxu0 0.0
    %943 = vmatpush1.msra.mxu0 0.0
    %944 = vmatprep.subr.mxu0 0.0
    %945 = vmatpush1.msra.mxu0 0.0
    %946 = vmatprep.subr.mxu0 0.0
    %947 = vmatpush1.msra.mxu0 0.0
    %948 = vmatprep.subr.mxu0 0.0
    %949 = vmatpush1.msra.mxu0 0.0
    %950 = vmatprep.subr.mxu0 0.0
    %951 = vmatpush1.msra.mxu0 0.0
    %952 = vmatprep.subr.mxu0 0.0
    %953 = vmatpush1.msra.mxu0 0.0
    %954 = vmatprep.subr.mxu0 0.0
    %955 = vmatpush1.msra.mxu0 0.0
    %956 = vmatprep.subr.mxu0 0.0
    %957 = vmatpush1.msra.mxu0 0.0
    %958 = vmatprep.subr.mxu0 0.0
    %959 = vmatpush1.msra.mxu0 0.0
    %960 = vmatprep.subr.mxu0 0.0
    %961 = vmatpush1.msra.mxu0 0.0
    %962 = vmatprep.subr.mxu0 0.0
    %963 = vmatpush1.msra.mxu0 0.0
    %964 = vmatprep.subr.mxu0 0.0
    %965 = vmatpush1.msra.mxu0 0.0
    %966 = vmatprep.subr.mxu0 0.0
    %967 = vmatpush1.msra.mxu0 0.0
    %968 = vmatprep.subr.mxu0 0.0
    %969 = vmatpush1.msra.mxu0 0.0
    %970 = vmatprep.subr.mxu0 0.0
    %971 = vmatpush1.msra.mxu0 0.0
    %972 = vmatprep.subr.mxu0 0.0
    %973 = vmatpush1.msra.mxu0 0.0
    %974 = vmatprep.subr.mxu0 0.0
    %975 = vmatpush1.msra.mxu0 0.0
    %976 = vmatprep.subr.mxu0 0.0
    %977 = vmatpush1.msra.mxu0 0.0
    %978 = vmatprep.subr.mxu0 0.0
    %979 = vmatpush1.msra.mxu0 0.0
    %980 = vmatprep.subr.mxu0 0.0
    %981 = vmatpush1.msra.mxu0 0.0
    %982 = vmatprep.subr.mxu0 0.0
    %983 = vmatpush1.msra.mxu0 0.0
    %984 = vmatprep.subr.mxu0 0.0
    %985 = vmatpush1.msra.mxu0 0.0
    %986 = vmatprep.subr.mxu0 0.0
    %987 = vmatpush1.msra.mxu0 0.0
    %988 = vmatprep.mubr.f32.mxu0 0.0
    %989 = vmatmul.mubr.f32.gmra.mrb[0].mxu0 %v919
    %v990 = vpop.f32.mrb[0].mxu0
    %v991 = vadd.f32 0.0, %v990
    %v992 = vpop.f32.mrb[0].mxu0
    %993 = vmatprep.mubr.f32.mxu0 0.0
    %994 = vmatmul.mubr.f32.gmra.mrb[0].mxu0 %v922
    %v995 = vpop.f32.mrb[0].mxu0
    %v996 = vadd.f32 0.0, %v995
    %v997 = vpop.f32.mrb[0].mxu0
    %998 = vdwg.mxu0
    %1001 = vrot.lane.b32.xlu0 %v991, 8
    %v1002 = vpop.permute.xlu0 %1001
    %1003 = vrot.lane.b32.xlu0 %v996, 8
    %v1004 = vpop.permute.xlu0 %1003
    %vm1007 = vcmask 130112
    %1008 = vst.msk [vmem:[#allocation2] sm:$0xff] %vm1007, %v1002
    %1009 = vst.msk [vmem:[#allocation2 + $0x8] sm:$0xff] %vm1007, %v1004
    %1010 = vset.pattern.permute.xlu0 1
    %1011 = vperm.xlu0 %1010, %v344
    %v1012 = vpop.permute.xlu0 %1011
    %1014 = vset.pattern.permute.xlu0 1
    %1015 = vperm.xlu0 %1014, %v345
    %v1016 = vpop.permute.xlu0 %1015
    %v1018 = vmul.f32 %v1012, %v783
    %v1019 = vmul.f32 %v1016, %v784
    %1020 = vrot.lane.b32.xlu0 %v177, 120
    %v1021 = vpop.permute.xlu0 %1020
    %1022 = vrot.lane.b32.xlu0 %v182, 120
    %v1023 = vpop.permute.xlu0 %1022
    %1024 = vrot.lane.b32.xlu0 %v177, 88
    %v1025 = vpop.permute.xlu0 %1024
    %1026 = vrot.lane.b32.xlu0 %v182, 88
    %v1027 = vpop.permute.xlu0 %1026
    %v1028 = vsel %vm366, %v1021, 0
    %v1030 = vsel %vm366, %v1023, 0
    %v1032 = vsel %vm366, %v1025, 0
    %v1034 = vsel %vm366, %v1027, 0
    %1036 = vmatprep.subr.mxu0 0.0
    %1037 = vmatpush1.xpose.msra.mxu0 %v1032
    %1038 = vmatprep.subr.mxu0 0.0
    %1039 = vmatpush1.xpose.msra.mxu0 %v1034
    %1040 = vmatprep.subr.mxu0 0.0
    %1041 = vmatpush1.xpose.msra.mxu0 0.0
    %1042 = vmatprep.subr.mxu0 0.0
    %1043 = vmatpush1.xpose.msra.mxu0 0.0
    %1044 = vmatprep.subr.mxu0 0.0
    %1045 = vmatpush1.xpose.msra.mxu0 0.0
    %1046 = vmatprep.subr.mxu0 0.0
    %1047 = vmatpush1.xpose.msra.mxu0 0.0
    %1048 = vmatprep.subr.mxu0 0.0
    %1049 = vmatpush1.xpose.msra.mxu0 0.0
    %1050 = vmatprep.subr.mxu0 0.0
    %1051 = vmatpush1.xpose.msra.mxu0 0.0
    %1052 = vmatprep.subr.mxu0 0.0
    %1053 = vmatpush1.xpose.msra.mxu0 0.0
    %1054 = vmatprep.subr.mxu0 0.0
    %1055 = vmatpush1.xpose.msra.mxu0 0.0
    %1056 = vmatprep.subr.mxu0 0.0
    %1057 = vmatpush1.xpose.msra.mxu0 0.0
    %1058 = vmatprep.subr.mxu0 0.0
    %1059 = vmatpush1.xpose.msra.mxu0 0.0
    %1060 = vmatprep.subr.mxu0 0.0
    %1061 = vmatpush1.xpose.msra.mxu0 0.0
    %1062 = vmatprep.subr.mxu0 0.0
    %1063 = vmatpush1.xpose.msra.mxu0 0.0
    %1064 = vmatprep.subr.mxu0 0.0
    %1065 = vmatpush1.xpose.msra.mxu0 0.0
    %1066 = vmatprep.subr.mxu0 0.0
    %1067 = vmatpush1.xpose.msra.mxu0 0.0
    %1068 = vmatprep.subr.mxu0 0.0
    %1069 = vmatpush1.xpose.msra.mxu0 0.0
    %1070 = vmatprep.subr.mxu0 0.0
    %1071 = vmatpush1.xpose.msra.mxu0 0.0
    %1072 = vmatprep.subr.mxu0 0.0
    %1073 = vmatpush1.xpose.msra.mxu0 0.0
    %1074 = vmatprep.subr.mxu0 0.0
    %1075 = vmatpush1.xpose.msra.mxu0 0.0
    %1076 = vmatprep.subr.mxu0 0.0
    %1077 = vmatpush1.xpose.msra.mxu0 0.0
    %1078 = vmatprep.subr.mxu0 0.0
    %1079 = vmatpush1.xpose.msra.mxu0 0.0
    %1080 = vmatprep.subr.mxu0 0.0
    %1081 = vmatpush1.xpose.msra.mxu0 0.0
    %1082 = vmatprep.subr.mxu0 0.0
    %1083 = vmatpush1.xpose.msra.mxu0 0.0
    %1084 = vmatprep.subr.mxu0 0.0
    %1085 = vmatpush1.xpose.msra.mxu0 0.0
    %1086 = vmatprep.subr.mxu0 0.0
    %1087 = vmatpush1.xpose.msra.mxu0 0.0
    %1088 = vmatprep.subr.mxu0 0.0
    %1089 = vmatpush1.xpose.msra.mxu0 0.0
    %1090 = vmatprep.subr.mxu0 0.0
    %1091 = vmatpush1.xpose.msra.mxu0 0.0
    %1092 = vmatprep.subr.mxu0 0.0
    %1093 = vmatpush1.xpose.msra.mxu0 0.0
    %1094 = vmatprep.subr.mxu0 0.0
    %1095 = vmatpush1.xpose.msra.mxu0 0.0
    %1096 = vmatprep.subr.mxu0 0.0
    %1097 = vmatpush1.xpose.msra.mxu0 0.0
    %1098 = vmatprep.subr.mxu0 0.0
    %1099 = vmatpush1.xpose.msra.mxu0 0.0
    %1100 = vmatprep.mubr.f32.mxu0 0.0
    %1101 = vmatmul.mubr.f32.gmra.mrb[0].mxu0 %v1028
    %v1102 = vpop.f32.mrb[0].mxu0
    %v1103 = vadd.f32 0.0, %v1102
    %v1104 = vpop.f32.mrb[0].mxu0
    %1105 = vmatprep.mubr.f32.mxu0 0.0
    %1106 = vmatmul.mubr.f32.gmra.mrb[0].mxu0 %v1030
    %v1107 = vpop.f32.mrb[0].mxu0
    %v1108 = vadd.f32 0.0, %v1107
    %v1109 = vpop.f32.mrb[0].mxu0
    %1110 = vdwg.mxu0
    %v1111 = vmul.f32 %v1103, 0.35355338
    %v1112 = vmul.f32 %v1108, 0.35355338
    %v1113 = vadd.f32 %v1111, %v1018
    %v1114 = vadd.f32 %v1112, %v1019
    %v1115 = vsel %vm454, %v1113, -inf
    %1116 = vmax.xlane.f32.xlu0 %v1115
    %v1117 = vpop.xlane.xlu0 %1116
    %v1118 = vsel %vm454, %v1114, -inf
    %1119 = vmax.xlane.f32.xlu0 %v1118
    %v1120 = vpop.xlane.xlu0 %1119
    %v1121 = vsub.f32 %v1113, %v1117
    %v1122 = vsub.f32 %v1114, %v1120
    %v1123 = vmul.f32 %v1121, 1.442695
    %v1124 = vpow.pop %v1123
    %v1125 = vmul.f32 %v1122, 1.442695
    %v1126 = vpow.pop %v1125
    %v1127 = vsel %vm454, %v1124, 0.0
    %1128 = vadd.xlane.f32.xlu0 %v1127
    %v1129 = vpop.xlane.xlu0 %1128
    %v1130 = vsel %vm454, %v1126, 0.0
    %1131 = vadd.xlane.f32.xlu0 %v1130
    %v1132 = vpop.xlane.xlu0 %1131
    %v1133 = vrcp.pop %v1129
    %v1134 = vrcp.pop %v1132
    %v1135 = vmul.f32 %v1124, %v1133
    %v1136 = vmul.f32 %v1126, %v1134
    %1137 = vrot.lane.b32.xlu0 %v177, 56
    %v1138 = vpop.permute.xlu0 %1137
    %1139 = vrot.lane.b32.xlu0 %v182, 56
    %v1140 = vpop.permute.xlu0 %1139
    %v1144 = vsel %vm454, %v1135, 0
    %v1147 = vsel %vm454, %v1136, 0
    %1149 = vmatprep.subr.mxu0 0.0
    %1150 = vmatpush1.msra.mxu0 %v1138
    %1151 = vmatprep.subr.mxu0 0.0
    %1152 = vmatpush1.msra.mxu0 %v1140
    %1153 = vmatprep.subr.mxu0 0.0
    %1154 = vmatpush1.msra.mxu0 0.0
    %1155 = vmatprep.subr.mxu0 0.0
    %1156 = vmatpush1.msra.mxu0 0.0
    %1157 = vmatprep.subr.mxu0 0.0
    %1158 = vmatpush1.msra.mxu0 0.0
    %1159 = vmatprep.subr.mxu0 0.0
    %1160 = vmatpush1.msra.mxu0 0.0
    %1161 = vmatprep.subr.mxu0 0.0
    %1162 = vmatpush1.msra.mxu0 0.0
    %1163 = vmatprep.subr.mxu0 0.0
    %1164 = vmatpush1.msra.mxu0 0.0
    %1165 = vmatprep.subr.mxu0 0.0
    %1166 = vmatpush1.msra.mxu0 0.0
    %1167 = vmatprep.subr.mxu0 0.0
    %1168 = vmatpush1.msra.mxu0 0.0
    %1169 = vmatprep.subr.mxu0 0.0
    %1170 = vmatpush1.msra.mxu0 0.0
    %1171 = vmatprep.subr.mxu0 0.0
    %1172 = vmatpush1.msra.mxu0 0.0
    %1173 = vmatprep.subr.mxu0 0.0
    %1174 = vmatpush1.msra.mxu0 0.0
    %1175 = vmatprep.subr.mxu0 0.0
    %1176 = vmatpush1.msra.mxu0 0.0
    %1177 = vmatprep.subr.mxu0 0.0
    %1178 = vmatpush1.msra.mxu0 0.0
    %1179 = vmatprep.subr.mxu0 0.0
    %1180 = vmatpush1.msra.mxu0 0.0
    %1181 = vmatprep.subr.mxu0 0.0
    %1182 = vmatpush1.msra.mxu0 0.0
    %1183 = vmatprep.subr.mxu0 0.0
    %1184 = vmatpush1.msra.mxu0 0.0
    %1185 = vmatprep.subr.mxu0 0.0
    %1186 = vmatpush1.msra.mxu0 0.0
    %1187 = vmatprep.subr.mxu0 0.0
    %1188 = vmatpush1.msra.mxu0 0.0
    %1189 = vmatprep.subr.mxu0 0.0
    %1190 = vmatpush1.msra.mxu0 0.0
    %1191 = vmatprep.subr.mxu0 0.0
    %1192 = vmatpush1.msra.mxu0 0.0
    %1193 = vmatprep.subr.mxu0 0.0
    %1194 = vmatpush1.msra.mxu0 0.0
    %1195 = vmatprep.subr.mxu0 0.0
    %1196 = vmatpush1.msra.mxu0 0.0
    %1197 = vmatprep.subr.mxu0 0.0
    %1198 = vmatpush1.msra.mxu0 0.0
    %1199 = vmatprep.subr.mxu0 0.0
    %1200 = vmatpush1.msra.mxu0 0.0
    %1201 = vmatprep.subr.mxu0 0.0
    %1202 = vmatpush1.msra.mxu0 0.0
    %1203 = vmatprep.subr.mxu0 0.0
    %1204 = vmatpush1.msra.mxu0 0.0
    %1205 = vmatprep.subr.mxu0 0.0
    %1206 = vmatpush1.msra.mxu0 0.0
    %1207 = vmatprep.subr.mxu0 0.0
    %1208 = vmatpush1.msra.mxu0 0.0
    %1209 = vmatprep.subr.mxu0 0.0
    %1210 = vmatpush1.msra.mxu0 0.0
    %1211 = vmatprep.subr.mxu0 0.0
    %1212 = vmatpush1.msra.mxu0 0.0
    %1213 = vmatprep.mubr.f32.mxu0 0.0
    %1214 = vmatmul.mubr.f32.gmra.mrb[0].mxu0 %v1144
    %v1215 = vpop.f32.mrb[0].mxu0
    %v1216 = vadd.f32 0.0, %v1215
    %v1217 = vpop.f32.mrb[0].mxu0
    %1218 = vmatprep.mubr.f32.mxu0 0.0
    %1219 = vmatmul.mubr.f32.gmra.mrb[0].mxu0 %v1147
    %v1220 = vpop.f32.mrb[0].mxu0
    %v1221 = vadd.f32 0.0, %v1220
    %v1222 = vpop.f32.mrb[0].mxu0
    %1223 = vdwg.mxu0
    %1226 = vrot.lane.b32.xlu0 %v1216, 8
    %v1227 = vpop.permute.xlu0 %1226
    %1228 = vrot.lane.b32.xlu0 %v1221, 8
    %v1229 = vpop.permute.xlu0 %1228
    %1232 = vst.msk [vmem:[#allocation2 + $0x10] sm:$0xff] %vm1007, %v1227
    %1233 = vst.msk [vmem:[#allocation2 + $0x18] sm:$0xff] %vm1007, %v1229
    %s1234 = scalar_lea.vmem [#allocation3], 32
    %v1235 = vld [vmem:[%s1234] sm:$0xff]
    %v1236 = vld [vmem:[%s1234 + $0x8] sm:$0xff]
    %1237 = vset.pattern.permute.xlu0 2
    %1238 = vperm.xlu0 %1237, %v342
    %v1239 = vpop.permute.xlu0 %1238
    %1241 = vset.pattern.permute.xlu0 2
    %1242 = vperm.xlu0 %1241, %v343
    %v1243 = vpop.permute.xlu0 %1242
    %v1245 = vmul.f32 %v1239, %v1235
    %v1246 = vmul.f32 %v1243, %v1236
    %1247 = vrot.lane.b32.xlu0 %v167, 112
    %v1248 = vpop.permute.xlu0 %1247
    %1249 = vrot.lane.b32.xlu0 %v172, 112
    %v1250 = vpop.permute.xlu0 %1249
    %1251 = vrot.lane.b32.xlu0 %v167, 80
    %v1252 = vpop.permute.xlu0 %1251
    %1253 = vrot.lane.b32.xlu0 %v172, 80
    %v1254 = vpop.permute.xlu0 %1253
    %v1255 = vsel %vm366, %v1248, 0
    %v1257 = vsel %vm366, %v1250, 0
    %v1259 = vsel %vm366, %v1252, 0
    %v1261 = vsel %vm366, %v1254, 0
    %1263 = vmatprep.subr.mxu0 0.0
    %1264 = vmatpush1.xpose.msra.mxu0 %v1259
    %1265 = vmatprep.subr.mxu0 0.0
    %1266 = vmatpush1.xpose.msra.mxu0 %v1261
    %1267 = vmatprep.subr.mxu0 0.0
    %1268 = vmatpush1.xpose.msra.mxu0 0.0
    %1269 = vmatprep.subr.mxu0 0.0
    %1270 = vmatpush1.xpose.msra.mxu0 0.0
    %1271 = vmatprep.subr.mxu0 0.0
    %1272 = vmatpush1.xpose.msra.mxu0 0.0
    %1273 = vmatprep.subr.mxu0 0.0
    %1274 = vmatpush1.xpose.msra.mxu0 0.0
    %1275 = vmatprep.subr.mxu0 0.0
    %1276 = vmatpush1.xpose.msra.mxu0 0.0
    %1277 = vmatprep.subr.mxu0 0.0
    %1278 = vmatpush1.xpose.msra.mxu0 0.0
    %1279 = vmatprep.subr.mxu0 0.0
    %1280 = vmatpush1.xpose.msra.mxu0 0.0
    %1281 = vmatprep.subr.mxu0 0.0
    %1282 = vmatpush1.xpose.msra.mxu0 0.0
    %1283 = vmatprep.subr.mxu0 0.0
    %1284 = vmatpush1.xpose.msra.mxu0 0.0
    %1285 = vmatprep.subr.mxu0 0.0
    %1286 = vmatpush1.xpose.msra.mxu0 0.0
    %1287 = vmatprep.subr.mxu0 0.0
    %1288 = vmatpush1.xpose.msra.mxu0 0.0
    %1289 = vmatprep.subr.mxu0 0.0
    %1290 = vmatpush1.xpose.msra.mxu0 0.0
    %1291 = vmatprep.subr.mxu0 0.0
    %1292 = vmatpush1.xpose.msra.mxu0 0.0
    %1293 = vmatprep.subr.mxu0 0.0
    %1294 = vmatpush1.xpose.msra.mxu0 0.0
    %1295 = vmatprep.subr.mxu0 0.0
    %1296 = vmatpush1.xpose.msra.mxu0 0.0
    %1297 = vmatprep.subr.mxu0 0.0
    %1298 = vmatpush1.xpose.msra.mxu0 0.0
    %1299 = vmatprep.subr.mxu0 0.0
    %1300 = vmatpush1.xpose.msra.mxu0 0.0
    %1301 = vmatprep.subr.mxu0 0.0
    %1302 = vmatpush1.xpose.msra.mxu0 0.0
    %1303 = vmatprep.subr.mxu0 0.0
    %1304 = vmatpush1.xpose.msra.mxu0 0.0
    %1305 = vmatprep.subr.mxu0 0.0
    %1306 = vmatpush1.xpose.msra.mxu0 0.0
    %1307 = vmatprep.subr.mxu0 0.0
    %1308 = vmatpush1.xpose.msra.mxu0 0.0
    %1309 = vmatprep.subr.mxu0 0.0
    %1310 = vmatpush1.xpose.msra.mxu0 0.0
    %1311 = vmatprep.subr.mxu0 0.0
    %1312 = vmatpush1.xpose.msra.mxu0 0.0
    %1313 = vmatprep.subr.mxu0 0.0
    %1314 = vmatpush1.xpose.msra.mxu0 0.0
    %1315 = vmatprep.subr.mxu0 0.0
    %1316 = vmatpush1.xpose.msra.mxu0 0.0
    %1317 = vmatprep.subr.mxu0 0.0
    %1318 = vmatpush1.xpose.msra.mxu0 0.0
    %1319 = vmatprep.subr.mxu0 0.0
    %1320 = vmatpush1.xpose.msra.mxu0 0.0
    %1321 = vmatprep.subr.mxu0 0.0
    %1322 = vmatpush1.xpose.msra.mxu0 0.0
    %1323 = vmatprep.subr.mxu0 0.0
    %1324 = vmatpush1.xpose.msra.mxu0 0.0
    %1325 = vmatprep.subr.mxu0 0.0
    %1326 = vmatpush1.xpose.msra.mxu0 0.0
    %1327 = vmatprep.mubr.f32.mxu0 0.0
    %1328 = vmatmul.mubr.f32.gmra.mrb[0].mxu0 %v1255
    %v1329 = vpop.f32.mrb[0].mxu0
    %v1330 = vadd.f32 0.0, %v1329
    %v1331 = vpop.f32.mrb[0].mxu0
    %1332 = vmatprep.mubr.f32.mxu0 0.0
    %1333 = vmatmul.mubr.f32.gmra.mrb[0].mxu0 %v1257
    %v1334 = vpop.f32.mrb[0].mxu0
    %v1335 = vadd.f32 0.0, %v1334
    %v1336 = vpop.f32.mrb[0].mxu0
    %1337 = vdwg.mxu0
    %v1338 = vmul.f32 %v1330, 0.35355338
    %v1339 = vmul.f32 %v1335, 0.35355338
    %v1340 = vadd.f32 %v1338, %v1245
    %v1341 = vadd.f32 %v1339, %v1246
    %v1342 = vsel %vm454, %v1340, -inf
    %1343 = vmax.xlane.f32.xlu0 %v1342
    %v1344 = vpop.xlane.xlu0 %1343
    %v1345 = vsel %vm454, %v1341, -inf
    %1346 = vmax.xlane.f32.xlu0 %v1345
    %v1347 = vpop.xlane.xlu0 %1346
    %v1348 = vsub.f32 %v1340, %v1344
    %v1349 = vsub.f32 %v1341, %v1347
    %v1350 = vmul.f32 %v1348, 1.442695
    %v1351 = vpow.pop %v1350
    %v1352 = vmul.f32 %v1349, 1.442695
    %v1353 = vpow.pop %v1352
    %v1354 = vsel %vm454, %v1351, 0.0
    %1355 = vadd.xlane.f32.xlu0 %v1354
    %v1356 = vpop.xlane.xlu0 %1355
    %v1357 = vsel %vm454, %v1353, 0.0
    %1358 = vadd.xlane.f32.xlu0 %v1357
    %v1359 = vpop.xlane.xlu0 %1358
    %v1360 = vrcp.pop %v1356
    %v1361 = vrcp.pop %v1359
    %v1362 = vmul.f32 %v1351, %v1360
    %v1363 = vmul.f32 %v1353, %v1361
    %1364 = vrot.lane.b32.xlu0 %v167, 48
    %v1365 = vpop.permute.xlu0 %1364
    %1366 = vrot.lane.b32.xlu0 %v172, 48
    %v1367 = vpop.permute.xlu0 %1366
    %v1371 = vsel %vm454, %v1362, 0
    %v1374 = vsel %vm454, %v1363, 0
    %1376 = vmatprep.subr.mxu0 0.0
    %1377 = vmatpush1.msra.mxu0 %v1365
    %1378 = vmatprep.subr.mxu0 0.0
    %1379 = vmatpush1.msra.mxu0 %v1367
    %1380 = vmatprep.subr.mxu0 0.0
    %1381 = vmatpush1.msra.mxu0 0.0
    %1382 = vmatprep.subr.mxu0 0.0
    %1383 = vmatpush1.msra.mxu0 0.0
    %1384 = vmatprep.subr.mxu0 0.0
    %1385 = vmatpush1.msra.mxu0 0.0
    %1386 = vmatprep.subr.mxu0 0.0
    %1387 = vmatpush1.msra.mxu0 0.0
    %1388 = vmatprep.subr.mxu0 0.0
    %1389 = vmatpush1.msra.mxu0 0.0
    %1390 = vmatprep.subr.mxu0 0.0
    %1391 = vmatpush1.msra.mxu0 0.0
    %1392 = vmatprep.subr.mxu0 0.0
    %1393 = vmatpush1.msra.mxu0 0.0
    %1394 = vmatprep.subr.mxu0 0.0
    %1395 = vmatpush1.msra.mxu0 0.0
    %1396 = vmatprep.subr.mxu0 0.0
    %1397 = vmatpush1.msra.mxu0 0.0
    %1398 = vmatprep.subr.mxu0 0.0
    %1399 = vmatpush1.msra.mxu0 0.0
    %1400 = vmatprep.subr.mxu0 0.0
    %1401 = vmatpush1.msra.mxu0 0.0
    %1402 = vmatprep.subr.mxu0 0.0
    %1403 = vmatpush1.msra.mxu0 0.0
    %1404 = vmatprep.subr.mxu0 0.0
    %1405 = vmatpush1.msra.mxu0 0.0
    %1406 = vmatprep.subr.mxu0 0.0
    %1407 = vmatpush1.msra.mxu0 0.0
    %1408 = vmatprep.subr.mxu0 0.0
    %1409 = vmatpush1.msra.mxu0 0.0
    %1410 = vmatprep.subr.mxu0 0.0
    %1411 = vmatpush1.msra.mxu0 0.0
    %1412 = vmatprep.subr.mxu0 0.0
    %1413 = vmatpush1.msra.mxu0 0.0
    %1414 = vmatprep.subr.mxu0 0.0
    %1415 = vmatpush1.msra.mxu0 0.0
    %1416 = vmatprep.subr.mxu0 0.0
    %1417 = vmatpush1.msra.mxu0 0.0
    %1418 = vmatprep.subr.mxu0 0.0
    %1419 = vmatpush1.msra.mxu0 0.0
    %1420 = vmatprep.subr.mxu0 0.0
    %1421 = vmatpush1.msra.mxu0 0.0
    %1422 = vmatprep.subr.mxu0 0.0
    %1423 = vmatpush1.msra.mxu0 0.0
    %1424 = vmatprep.subr.mxu0 0.0
    %1425 = vmatpush1.msra.mxu0 0.0
    %1426 = vmatprep.subr.mxu0 0.0
    %1427 = vmatpush1.msra.mxu0 0.0
    %1428 = vmatprep.subr.mxu0 0.0
    %1429 = vmatpush1.msra.mxu0 0.0
    %1430 = vmatprep.subr.mxu0 0.0
    %1431 = vmatpush1.msra.mxu0 0.0
    %1432 = vmatprep.subr.mxu0 0.0
    %1433 = vmatpush1.msra.mxu0 0.0
    %1434 = vmatprep.subr.mxu0 0.0
    %1435 = vmatpush1.msra.mxu0 0.0
    %1436 = vmatprep.subr.mxu0 0.0
    %1437 = vmatpush1.msra.mxu0 0.0
    %1438 = vmatprep.subr.mxu0 0.0
    %1439 = vmatpush1.msra.mxu0 0.0
    %1440 = vmatprep.mubr.f32.mxu0 0.0
    %1441 = vmatmul.mubr.f32.gmra.mrb[0].mxu0 %v1371
    %v1442 = vpop.f32.mrb[0].mxu0
    %v1443 = vadd.f32 0.0, %v1442
    %v1444 = vpop.f32.mrb[0].mxu0
    %1445 = vmatprep.mubr.f32.mxu0 0.0
    %1446 = vmatmul.mubr.f32.gmra.mrb[0].mxu0 %v1374
    %v1447 = vpop.f32.mrb[0].mxu0
    %v1448 = vadd.f32 0.0, %v1447
    %v1449 = vpop.f32.mrb[0].mxu0
    %1450 = vdwg.mxu0
    %1453 = vrot.lane.b32.xlu0 %v1443, 16
    %v1454 = vpop.permute.xlu0 %1453
    %1455 = vrot.lane.b32.xlu0 %v1448, 16
    %v1456 = vpop.permute.xlu0 %1455
    %vm1459 = vcmask 195712
    %1460 = vst.msk [vmem:[#allocation2] sm:$0xff] %vm1459, %v1454
    %1461 = vst.msk [vmem:[#allocation2 + $0x8] sm:$0xff] %vm1459, %v1456
    %1462 = vset.pattern.permute.xlu0 2
    %1463 = vperm.xlu0 %1462, %v344
    %v1464 = vpop.permute.xlu0 %1463
    %1466 = vset.pattern.permute.xlu0 2
    %1467 = vperm.xlu0 %1466, %v345
    %v1468 = vpop.permute.xlu0 %1467
    %v1470 = vmul.f32 %v1464, %v1235
    %v1471 = vmul.f32 %v1468, %v1236
    %1472 = vrot.lane.b32.xlu0 %v177, 112
    %v1473 = vpop.permute.xlu0 %1472
    %1474 = vrot.lane.b32.xlu0 %v182, 112
    %v1475 = vpop.permute.xlu0 %1474
    %1476 = vrot.lane.b32.xlu0 %v177, 80
    %v1477 = vpop.permute.xlu0 %1476
    %1478 = vrot.lane.b32.xlu0 %v182, 80
    %v1479 = vpop.permute.xlu0 %1478
    %v1480 = vsel %vm366, %v1473, 0
    %v1482 = vsel %vm366, %v1475, 0
    %v1484 = vsel %vm366, %v1477, 0
    %v1486 = vsel %vm366, %v1479, 0
    %1488 = vmatprep.subr.mxu0 0.0
    %1489 = vmatpush1.xpose.msra.mxu0 %v1484
    %1490 = vmatprep.subr.mxu0 0.0
    %1491 = vmatpush1.xpose.msra.mxu0 %v1486
    %1492 = vmatprep.subr.mxu0 0.0
    %1493 = vmatpush1.xpose.msra.mxu0 0.0
    %1494 = vmatprep.subr.mxu0 0.0
    %1495 = vmatpush1.xpose.msra.mxu0 0.0
    %1496 = vmatprep.subr.mxu0 0.0
    %1497 = vmatpush1.xpose.msra.mxu0 0.0
    %1498 = vmatprep.subr.mxu0 0.0
    %1499 = vmatpush1.xpose.msra.mxu0 0.0
    %1500 = vmatprep.subr.mxu0 0.0
    %1501 = vmatpush1.xpose.msra.mxu0 0.0
    %1502 = vmatprep.subr.mxu0 0.0
    %1503 = vmatpush1.xpose.msra.mxu0 0.0
    %1504 = vmatprep.subr.mxu0 0.0
    %1505 = vmatpush1.xpose.msra.mxu0 0.0
    %1506 = vmatprep.subr.mxu0 0.0
    %1507 = vmatpush1.xpose.msra.mxu0 0.0
    %1508 = vmatprep.subr.mxu0 0.0
    %1509 = vmatpush1.xpose.msra.mxu0 0.0
    %1510 = vmatprep.subr.mxu0 0.0
    %1511 = vmatpush1.xpose.msra.mxu0 0.0
    %1512 = vmatprep.subr.mxu0 0.0
    %1513 = vmatpush1.xpose.msra.mxu0 0.0
    %1514 = vmatprep.subr.mxu0 0.0
    %1515 = vmatpush1.xpose.msra.mxu0 0.0
    %1516 = vmatprep.subr.mxu0 0.0
    %1517 = vmatpush1.xpose.msra.mxu0 0.0
    %1518 = vmatprep.subr.mxu0 0.0
    %1519 = vmatpush1.xpose.msra.mxu0 0.0
    %1520 = vmatprep.subr.mxu0 0.0
    %1521 = vmatpush1.xpose.msra.mxu0 0.0
    %1522 = vmatprep.subr.mxu0 0.0
    %1523 = vmatpush1.xpose.msra.mxu0 0.0
    %1524 = vmatprep.subr.mxu0 0.0
    %1525 = vmatpush1.xpose.msra.mxu0 0.0
    %1526 = vmatprep.subr.mxu0 0.0
    %1527 = vmatpush1.xpose.msra.mxu0 0.0
    %1528 = vmatprep.subr.mxu0 0.0
    %1529 = vmatpush1.xpose.msra.mxu0 0.0
    %1530 = vmatprep.subr.mxu0 0.0
    %1531 = vmatpush1.xpose.msra.mxu0 0.0
    %1532 = vmatprep.subr.mxu0 0.0
    %1533 = vmatpush1.xpose.msra.mxu0 0.0
    %1534 = vmatprep.subr.mxu0 0.0
    %1535 = vmatpush1.xpose.msra.mxu0 0.0
    %1536 = vmatprep.subr.mxu0 0.0
    %1537 = vmatpush1.xpose.msra.mxu0 0.0
    %1538 = vmatprep.subr.mxu0 0.0
    %1539 = vmatpush1.xpose.msra.mxu0 0.0
    %1540 = vmatprep.subr.mxu0 0.0
    %1541 = vmatpush1.xpose.msra.mxu0 0.0
    %1542 = vmatprep.subr.mxu0 0.0
    %1543 = vmatpush1.xpose.msra.mxu0 0.0
    %1544 = vmatprep.subr.mxu0 0.0
    %1545 = vmatpush1.xpose.msra.mxu0 0.0
    %1546 = vmatprep.subr.mxu0 0.0
    %1547 = vmatpush1.xpose.msra.mxu0 0.0
    %1548 = vmatprep.subr.mxu0 0.0
    %1549 = vmatpush1.xpose.msra.mxu0 0.0
    %1550 = vmatprep.subr.mxu0 0.0
    %1551 = vmatpush1.xpose.msra.mxu0 0.0
    %1552 = vmatprep.mubr.f32.mxu0 0.0
    %1553 = vmatmul.mubr.f32.gmra.mrb[0].mxu0 %v1480
    %v1554 = vpop.f32.mrb[0].mxu0
    %v1555 = vadd.f32 0.0, %v1554
    %v1556 = vpop.f32.mrb[0].mxu0
    %1557 = vmatprep.mubr.f32.mxu0 0.0
    %1558 = vmatmul.mubr.f32.gmra.mrb[0].mxu0 %v1482
    %v1559 = vpop.f32.mrb[0].mxu0
    %v1560 = vadd.f32 0.0, %v1559
    %v1561 = vpop.f32.mrb[0].mxu0
    %1562 = vdwg.mxu0
    %v1563 = vmul.f32 %v1555, 0.35355338
    %v1564 = vmul.f32 %v1560, 0.35355338
    %v1565 = vadd.f32 %v1563, %v1470
    %v1566 = vadd.f32 %v1564, %v1471
    %v1567 = vsel %vm454, %v1565, -inf
    %1568 = vmax.xlane.f32.xlu0 %v1567
    %v1569 = vpop.xlane.xlu0 %1568
    %v1570 = vsel %vm454, %v1566, -inf
    %1571 = vmax.xlane.f32.xlu0 %v1570
    %v1572 = vpop.xlane.xlu0 %1571
    %v1573 = vsub.f32 %v1565, %v1569
    %v1574 = vsub.f32 %v1566, %v1572
    %v1575 = vmul.f32 %v1573, 1.442695
    %v1576 = vpow.pop %v1575
    %v1577 = vmul.f32 %v1574, 1.442695
    %v1578 = vpow.pop %v1577
    %v1579 = vsel %vm454, %v1576, 0.0
    %1580 = vadd.xlane.f32.xlu0 %v1579
    %v1581 = vpop.xlane.xlu0 %1580
    %v1582 = vsel %vm454, %v1578, 0.0
    %1583 = vadd.xlane.f32.xlu0 %v1582
    %v1584 = vpop.xlane.xlu0 %1583
    %v1585 = vrcp.pop %v1581
    %v1586 = vrcp.pop %v1584
    %v1587 = vmul.f32 %v1576, %v1585
    %v1588 = vmul.f32 %v1578, %v1586
    %1589 = vrot.lane.b32.xlu0 %v177, 48
    %v1590 = vpop.permute.xlu0 %1589
    %1591 = vrot.lane.b32.xlu0 %v182, 48
    %v1592 = vpop.permute.xlu0 %1591
    %v1596 = vsel %vm454, %v1587, 0
    %v1599 = vsel %vm454, %v1588, 0
    %1601 = vmatprep.subr.mxu0 0.0
    %1602 = vmatpush1.msra.mxu0 %v1590
    %1603 = vmatprep.subr.mxu0 0.0
    %1604 = vmatpush1.msra.mxu0 %v1592
    %1605 = vmatprep.subr.mxu0 0.0
    %1606 = vmatpush1.msra.mxu0 0.0
    %1607 = vmatprep.subr.mxu0 0.0
    %1608 = vmatpush1.msra.mxu0 0.0
    %1609 = vmatprep.subr.mxu0 0.0
    %1610 = vmatpush1.msra.mxu0 0.0
    %1611 = vmatprep.subr.mxu0 0.0
    %1612 = vmatpush1.msra.mxu0 0.0
    %1613 = vmatprep.subr.mxu0 0.0
    %1614 = vmatpush1.msra.mxu0 0.0
    %1615 = vmatprep.subr.mxu0 0.0
    %1616 = vmatpush1.msra.mxu0 0.0
    %1617 = vmatprep.subr.mxu0 0.0
    %1618 = vmatpush1.msra.mxu0 0.0
    %1619 = vmatprep.subr.mxu0 0.0
    %1620 = vmatpush1.msra.mxu0 0.0
    %1621 = vmatprep.subr.mxu0 0.0
    %1622 = vmatpush1.msra.mxu0 0.0
    %1623 = vmatprep.subr.mxu0 0.0
    %1624 = vmatpush1.msra.mxu0 0.0
    %1625 = vmatprep.subr.mxu0 0.0
    %1626 = vmatpush1.msra.mxu0 0.0
    %1627 = vmatprep.subr.mxu0 0.0
    %1628 = vmatpush1.msra.mxu0 0.0
    %1629 = vmatprep.subr.mxu0 0.0
    %1630 = vmatpush1.msra.mxu0 0.0
    %1631 = vmatprep.subr.mxu0 0.0
    %1632 = vmatpush1.msra.mxu0 0.0
    %1633 = vmatprep.subr.mxu0 0.0
    %1634 = vmatpush1.msra.mxu0 0.0
    %1635 = vmatprep.subr.mxu0 0.0
    %1636 = vmatpush1.msra.mxu0 0.0
    %1637 = vmatprep.subr.mxu0 0.0
    %1638 = vmatpush1.msra.mxu0 0.0
    %1639 = vmatprep.subr.mxu0 0.0
    %1640 = vmatpush1.msra.mxu0 0.0
    %1641 = vmatprep.subr.mxu0 0.0
    %1642 = vmatpush1.msra.mxu0 0.0
    %1643 = vmatprep.subr.mxu0 0.0
    %1644 = vmatpush1.msra.mxu0 0.0
    %1645 = vmatprep.subr.mxu0 0.0
    %1646 = vmatpush1.msra.mxu0 0.0
    %1647 = vmatprep.subr.mxu0 0.0
    %1648 = vmatpush1.msra.mxu0 0.0
    %1649 = vmatprep.subr.mxu0 0.0
    %1650 = vmatpush1.msra.mxu0 0.0
    %1651 = vmatprep.subr.mxu0 0.0
    %1652 = vmatpush1.msra.mxu0 0.0
    %1653 = vmatprep.subr.mxu0 0.0
    %1654 = vmatpush1.msra.mxu0 0.0
    %1655 = vmatprep.subr.mxu0 0.0
    %1656 = vmatpush1.msra.mxu0 0.0
    %1657 = vmatprep.subr.mxu0 0.0
    %1658 = vmatpush1.msra.mxu0 0.0
    %1659 = vmatprep.subr.mxu0 0.0
    %1660 = vmatpush1.msra.mxu0 0.0
    %1661 = vmatprep.subr.mxu0 0.0
    %1662 = vmatpush1.msra.mxu0 0.0
    %1663 = vmatprep.subr.mxu0 0.0
    %1664 = vmatpush1.msra.mxu0 0.0
    %1665 = vmatprep.mubr.f32.mxu0 0.0
    %1666 = vmatmul.mubr.f32.gmra.mrb[0].mxu0 %v1596
    %v1667 = vpop.f32.mrb[0].mxu0
    %v1668 = vadd.f32 0.0, %v1667
    %v1669 = vpop.f32.mrb[0].mxu0
    %1670 = vmatprep.mubr.f32.mxu0 0.0
    %1671 = vmatmul.mubr.f32.gmra.mrb[0].mxu0 %v1599
    %v1672 = vpop.f32.mrb[0].mxu0
    %v1673 = vadd.f32 0.0, %v1672
    %v1674 = vpop.f32.mrb[0].mxu0
    %1675 = vdwg.mxu0
    %1678 = vrot.lane.b32.xlu0 %v1668, 16
    %v1679 = vpop.permute.xlu0 %1678
    %1680 = vrot.lane.b32.xlu0 %v1673, 16
    %v1681 = vpop.permute.xlu0 %1680
    %1684 = vst.msk [vmem:[#allocation2 + $0x10] sm:$0xff] %vm1459, %v1679
    %1685 = vst.msk [vmem:[#allocation2 + $0x18] sm:$0xff] %vm1459, %v1681
    %s1686 = scalar_lea.vmem [#allocation3], 48
    %v1687 = vld [vmem:[%s1686] sm:$0xff]
    %v1688 = vld [vmem:[%s1686 + $0x8] sm:$0xff]
    %1689 = vset.pattern.permute.xlu0 3
    %1690 = vperm.xlu0 %1689, %v342
    %v1691 = vpop.permute.xlu0 %1690
    %1693 = vset.pattern.permute.xlu0 3
    %1694 = vperm.xlu0 %1693, %v343
    %v1695 = vpop.permute.xlu0 %1694
    %v1697 = vmul.f32 %v1691, %v1687
    %v1698 = vmul.f32 %v1695, %v1688
    %1699 = vrot.lane.b32.xlu0 %v167, 104
    %v1700 = vpop.permute.xlu0 %1699
    %1701 = vrot.lane.b32.xlu0 %v172, 104
    %v1702 = vpop.permute.xlu0 %1701
    %1703 = vrot.lane.b32.xlu0 %v167, 72
    %v1704 = vpop.permute.xlu0 %1703
    %1705 = vrot.lane.b32.xlu0 %v172, 72
    %v1706 = vpop.permute.xlu0 %1705
    %v1707 = vsel %vm366, %v1700, 0
    %v1709 = vsel %vm366, %v1702, 0
    %v1711 = vsel %vm366, %v1704, 0
    %v1713 = vsel %vm366, %v1706, 0
    %1715 = vmatprep.subr.mxu0 0.0
    %1716 = vmatpush1.xpose.msra.mxu0 %v1711
    %1717 = vmatprep.subr.mxu0 0.0
    %1718 = vmatpush1.xpose.msra.mxu0 %v1713
    %1719 = vmatprep.subr.mxu0 0.0
    %1720 = vmatpush1.xpose.msra.mxu0 0.0
    %1721 = vmatprep.subr.mxu0 0.0
    %1722 = vmatpush1.xpose.msra.mxu0 0.0
    %1723 = vmatprep.subr.mxu0 0.0
    %1724 = vmatpush1.xpose.msra.mxu0 0.0
    %1725 = vmatprep.subr.mxu0 0.0
    %1726 = vmatpush1.xpose.msra.mxu0 0.0
    %1727 = vmatprep.subr.mxu0 0.0
    %1728 = vmatpush1.xpose.msra.mxu0 0.0
    %1729 = vmatprep.subr.mxu0 0.0
    %1730 = vmatpush1.xpose.msra.mxu0 0.0
    %1731 = vmatprep.subr.mxu0 0.0
    %1732 = vmatpush1.xpose.msra.mxu0 0.0
    %1733 = vmatprep.subr.mxu0 0.0
    %1734 = vmatpush1.xpose.msra.mxu0 0.0
    %1735 = vmatprep.subr.mxu0 0.0
    %1736 = vmatpush1.xpose.msra.mxu0 0.0
    %1737 = vmatprep.subr.mxu0 0.0
    %1738 = vmatpush1.xpose.msra.mxu0 0.0
    %1739 = vmatprep.subr.mxu0 0.0
    %1740 = vmatpush1.xpose.msra.mxu0 0.0
    %1741 = vmatprep.subr.mxu0 0.0
    %1742 = vmatpush1.xpose.msra.mxu0 0.0
    %1743 = vmatprep.subr.mxu0 0.0
    %1744 = vmatpush1.xpose.msra.mxu0 0.0
    %1745 = vmatprep.subr.mxu0 0.0
    %1746 = vmatpush1.xpose.msra.mxu0 0.0
    %1747 = vmatprep.subr.mxu0 0.0
    %1748 = vmatpush1.xpose.msra.mxu0 0.0
    %1749 = vmatprep.subr.mxu0 0.0
    %1750 = vmatpush1.xpose.msra.mxu0 0.0
    %1751 = vmatprep.subr.mxu0 0.0
    %1752 = vmatpush1.xpose.msra.mxu0 0.0
    %1753 = vmatprep.subr.mxu0 0.0
    %1754 = vmatpush1.xpose.msra.mxu0 0.0
    %1755 = vmatprep.subr.mxu0 0.0
    %1756 = vmatpush1.xpose.msra.mxu0 0.0
    %1757 = vmatprep.subr.mxu0 0.0
    %1758 = vmatpush1.xpose.msra.mxu0 0.0
    %1759 = vmatprep.subr.mxu0 0.0
    %1760 = vmatpush1.xpose.msra.mxu0 0.0
    %1761 = vmatprep.subr.mxu0 0.0
    %1762 = vmatpush1.xpose.msra.mxu0 0.0
    %1763 = vmatprep.subr.mxu0 0.0
    %1764 = vmatpush1.xpose.msra.mxu0 0.0
    %1765 = vmatprep.subr.mxu0 0.0
    %1766 = vmatpush1.xpose.msra.mxu0 0.0
    %1767 = vmatprep.subr.mxu0 0.0
    %1768 = vmatpush1.xpose.msra.mxu0 0.0
    %1769 = vmatprep.subr.mxu0 0.0
    %1770 = vmatpush1.xpose.msra.mxu0 0.0
    %1771 = vmatprep.subr.mxu0 0.0
    %1772 = vmatpush1.xpose.msra.mxu0 0.0
    %1773 = vmatprep.subr.mxu0 0.0
    %1774 = vmatpush1.xpose.msra.mxu0 0.0
    %1775 = vmatprep.subr.mxu0 0.0
    %1776 = vmatpush1.xpose.msra.mxu0 0.0
    %1777 = vmatprep.subr.mxu0 0.0
    %1778 = vmatpush1.xpose.msra.mxu0 0.0
    %1779 = vmatprep.mubr.f32.mxu0 0.0
    %1780 = vmatmul.mubr.f32.gmra.mrb[0].mxu0 %v1707
    %v1781 = vpop.f32.mrb[0].mxu0
    %v1782 = vadd.f32 0.0, %v1781
    %v1783 = vpop.f32.mrb[0].mxu0
    %1784 = vmatprep.mubr.f32.mxu0 0.0
    %1785 = vmatmul.mubr.f32.gmra.mrb[0].mxu0 %v1709
    %v1786 = vpop.f32.mrb[0].mxu0
    %v1787 = vadd.f32 0.0, %v1786
    %v1788 = vpop.f32.mrb[0].mxu0
    %1789 = vdwg.mxu0
    %v1790 = vmul.f32 %v1782, 0.35355338
    %v1791 = vmul.f32 %v1787, 0.35355338
    %v1792 = vadd.f32 %v1790, %v1697
    %v1793 = vadd.f32 %v1791, %v1698
    %v1794 = vsel %vm454, %v1792, -inf
    %1795 = vmax.xlane.f32.xlu0 %v1794
    %v1796 = vpop.xlane.xlu0 %1795
    %v1797 = vsel %vm454, %v1793, -inf
    %1798 = vmax.xlane.f32.xlu0 %v1797
    %v1799 = vpop.xlane.xlu0 %1798
    %v1800 = vsub.f32 %v1792, %v1796
    %v1801 = vsub.f32 %v1793, %v1799
    %v1802 = vmul.f32 %v1800, 1.442695
    %v1803 = vpow.pop %v1802
    %v1804 = vmul.f32 %v1801, 1.442695
    %v1805 = vpow.pop %v1804
    %v1806 = vsel %vm454, %v1803, 0.0
    %1807 = vadd.xlane.f32.xlu0 %v1806
    %v1808 = vpop.xlane.xlu0 %1807
    %v1809 = vsel %vm454, %v1805, 0.0
    %1810 = vadd.xlane.f32.xlu0 %v1809
    %v1811 = vpop.xlane.xlu0 %1810
    %v1812 = vrcp.pop %v1808
    %v1813 = vrcp.pop %v1811
    %v1814 = vmul.f32 %v1803, %v1812
    %v1815 = vmul.f32 %v1805, %v1813
    %1816 = vrot.lane.b32.xlu0 %v167, 40
    %v1817 = vpop.permute.xlu0 %1816
    %1818 = vrot.lane.b32.xlu0 %v172, 40
    %v1819 = vpop.permute.xlu0 %1818
    %v1823 = vsel %vm454, %v1814, 0
    %v1826 = vsel %vm454, %v1815, 0
    %1828 = vmatprep.subr.mxu0 0.0
    %1829 = vmatpush1.msra.mxu0 %v1817
    %1830 = vmatprep.subr.mxu0 0.0
    %1831 = vmatpush1.msra.mxu0 %v1819
    %1832 = vmatprep.subr.mxu0 0.0
    %1833 = vmatpush1.msra.mxu0 0.0
    %1834 = vmatprep.subr.mxu0 0.0
    %1835 = vmatpush1.msra.mxu0 0.0
    %1836 = vmatprep.subr.mxu0 0.0
    %1837 = vmatpush1.msra.mxu0 0.0
    %1838 = vmatprep.subr.mxu0 0.0
    %1839 = vmatpush1.msra.mxu0 0.0
    %1840 = vmatprep.subr.mxu0 0.0
    %1841 = vmatpush1.msra.mxu0 0.0
    %1842 = vmatprep.subr.mxu0 0.0
    %1843 = vmatpush1.msra.mxu0 0.0
    %1844 = vmatprep.subr.mxu0 0.0
    %1845 = vmatpush1.msra.mxu0 0.0
    %1846 = vmatprep.subr.mxu0 0.0
    %1847 = vmatpush1.msra.mxu0 0.0
    %1848 = vmatprep.subr.mxu0 0.0
    %1849 = vmatpush1.msra.mxu0 0.0
    %1850 = vmatprep.subr.mxu0 0.0
    %1851 = vmatpush1.msra.mxu0 0.0
    %1852 = vmatprep.subr.mxu0 0.0
    %1853 = vmatpush1.msra.mxu0 0.0
    %1854 = vmatprep.subr.mxu0 0.0
    %1855 = vmatpush1.msra.mxu0 0.0
    %1856 = vmatprep.subr.mxu0 0.0
    %1857 = vmatpush1.msra.mxu0 0.0
    %1858 = vmatprep.subr.mxu0 0.0
    %1859 = vmatpush1.msra.mxu0 0.0
    %1860 = vmatprep.subr.mxu0 0.0
    %1861 = vmatpush1.msra.mxu0 0.0
    %1862 = vmatprep.subr.mxu0 0.0
    %1863 = vmatpush1.msra.mxu0 0.0
    %1864 = vmatprep.subr.mxu0 0.0
    %1865 = vmatpush1.msra.mxu0 0.0
    %1866 = vmatprep.subr.mxu0 0.0
    %1867 = vmatpush1.msra.mxu0 0.0
    %1868 = vmatprep.subr.mxu0 0.0
    %1869 = vmatpush1.msra.mxu0 0.0
    %1870 = vmatprep.subr.mxu0 0.0
    %1871 = vmatpush1.msra.mxu0 0.0
    %1872 = vmatprep.subr.mxu0 0.0
    %1873 = vmatpush1.msra.mxu0 0.0
    %1874 = vmatprep.subr.mxu0 0.0
    %1875 = vmatpush1.msra.mxu0 0.0
    %1876 = vmatprep.subr.mxu0 0.0
    %1877 = vmatpush1.msra.mxu0 0.0
    %1878 = vmatprep.subr.mxu0 0.0
    %1879 = vmatpush1.msra.mxu0 0.0
    %1880 = vmatprep.subr.mxu0 0.0
    %1881 = vmatpush1.msra.mxu0 0.0
    %1882 = vmatprep.subr.mxu0 0.0
    %1883 = vmatpush1.msra.mxu0 0.0
    %1884 = vmatprep.subr.mxu0 0.0
    %1885 = vmatpush1.msra.mxu0 0.0
    %1886 = vmatprep.subr.mxu0 0.0
    %1887 = vmatpush1.msra.mxu0 0.0
    %1888 = vmatprep.subr.mxu0 0.0
    %1889 = vmatpush1.msra.mxu0 0.0
    %1890 = vmatprep.subr.mxu0 0.0
    %1891 = vmatpush1.msra.mxu0 0.0
    %1892 = vmatprep.mubr.f32.mxu0 0.0
    %1893 = vmatmul.mubr.f32.gmra.mrb[0].mxu0 %v1823
    %v1894 = vpop.f32.mrb[0].mxu0
    %v1895 = vadd.f32 0.0, %v1894
    %v1896 = vpop.f32.mrb[0].mxu0
    %1897 = vmatprep.mubr.f32.mxu0 0.0
    %1898 = vmatmul.mubr.f32.gmra.mrb[0].mxu0 %v1826
    %v1899 = vpop.f32.mrb[0].mxu0
    %v1900 = vadd.f32 0.0, %v1899
    %v1901 = vpop.f32.mrb[0].mxu0
    %1902 = vdwg.mxu0
    %1905 = vrot.lane.b32.xlu0 %v1895, 24
    %v1906 = vpop.permute.xlu0 %1905
    %1907 = vrot.lane.b32.xlu0 %v1900, 24
    %v1908 = vpop.permute.xlu0 %1907
    %vm1911 = vcmask 261312
    %1912 = vst.msk [vmem:[#allocation2] sm:$0xff] %vm1911, %v1906
    %1913 = vst.msk [vmem:[#allocation2 + $0x8] sm:$0xff] %vm1911, %v1908
    %1914 = vset.pattern.permute.xlu0 3
    %1915 = vperm.xlu0 %1914, %v344
    %v1916 = vpop.permute.xlu0 %1915
    %1918 = vset.pattern.permute.xlu0 3
    %1919 = vperm.xlu0 %1918, %v345
    %v1920 = vpop.permute.xlu0 %1919
    %v1922 = vmul.f32 %v1916, %v1687
    %v1923 = vmul.f32 %v1920, %v1688
    %1924 = vrot.lane.b32.xlu0 %v177, 104
    %v1925 = vpop.permute.xlu0 %1924
    %1926 = vrot.lane.b32.xlu0 %v182, 104
    %v1927 = vpop.permute.xlu0 %1926
    %1928 = vrot.lane.b32.xlu0 %v177, 72
    %v1929 = vpop.permute.xlu0 %1928
    %1930 = vrot.lane.b32.xlu0 %v182, 72
    %v1931 = vpop.permute.xlu0 %1930
    %v1932 = vsel %vm366, %v1925, 0
    %v1934 = vsel %vm366, %v1927, 0
    %v1936 = vsel %vm366, %v1929, 0
    %v1938 = vsel %vm366, %v1931, 0
    %1940 = vmatprep.subr.mxu0 0.0
    %1941 = vmatpush1.xpose.msra.mxu0 %v1936
    %1942 = vmatprep.subr.mxu0 0.0
    %1943 = vmatpush1.xpose.msra.mxu0 %v1938
    %1944 = vmatprep.subr.mxu0 0.0
    %1945 = vmatpush1.xpose.msra.mxu0 0.0
    %1946 = vmatprep.subr.mxu0 0.0
    %1947 = vmatpush1.xpose.msra.mxu0 0.0
    %1948 = vmatprep.subr.mxu0 0.0
    %1949 = vmatpush1.xpose.msra.mxu0 0.0
    %1950 = vmatprep.subr.mxu0 0.0
    %1951 = vmatpush1.xpose.msra.mxu0 0.0
    %1952 = vmatprep.subr.mxu0 0.0
    %1953 = vmatpush1.xpose.msra.mxu0 0.0
    %1954 = vmatprep.subr.mxu0 0.0
    %1955 = vmatpush1.xpose.msra.mxu0 0.0
    %1956 = vmatprep.subr.mxu0 0.0
    %1957 = vmatpush1.xpose.msra.mxu0 0.0
    %1958 = vmatprep.subr.mxu0 0.0
    %1959 = vmatpush1.xpose.msra.mxu0 0.0
    %1960 = vmatprep.subr.mxu0 0.0
    %1961 = vmatpush1.xpose.msra.mxu0 0.0
    %1962 = vmatprep.subr.mxu0 0.0
    %1963 = vmatpush1.xpose.msra.mxu0 0.0
    %1964 = vmatprep.subr.mxu0 0.0
    %1965 = vmatpush1.xpose.msra.mxu0 0.0
    %1966 = vmatprep.subr.mxu0 0.0
    %1967 = vmatpush1.xpose.msra.mxu0 0.0
    %1968 = vmatprep.subr.mxu0 0.0
    %1969 = vmatpush1.xpose.msra.mxu0 0.0
    %1970 = vmatprep.subr.mxu0 0.0
    %1971 = vmatpush1.xpose.msra.mxu0 0.0
    %1972 = vmatprep.subr.mxu0 0.0
    %1973 = vmatpush1.xpose.msra.mxu0 0.0
    %1974 = vmatprep.subr.mxu0 0.0
    %1975 = vmatpush1.xpose.msra.mxu0 0.0
    %1976 = vmatprep.subr.mxu0 0.0
    %1977 = vmatpush1.xpose.msra.mxu0 0.0
    %1978 = vmatprep.subr.mxu0 0.0
    %1979 = vmatpush1.xpose.msra.mxu0 0.0
    %1980 = vmatprep.subr.mxu0 0.0
    %1981 = vmatpush1.xpose.msra.mxu0 0.0
    %1982 = vmatprep.subr.mxu0 0.0
    %1983 = vmatpush1.xpose.msra.mxu0 0.0
    %1984 = vmatprep.subr.mxu0 0.0
    %1985 = vmatpush1.xpose.msra.mxu0 0.0
    %1986 = vmatprep.subr.mxu0 0.0
    %1987 = vmatpush1.xpose.msra.mxu0 0.0
    %1988 = vmatprep.subr.mxu0 0.0
    %1989 = vmatpush1.xpose.msra.mxu0 0.0
    %1990 = vmatprep.subr.mxu0 0.0
    %1991 = vmatpush1.xpose.msra.mxu0 0.0
    %1992 = vmatprep.subr.mxu0 0.0
    %1993 = vmatpush1.xpose.msra.mxu0 0.0
    %1994 = vmatprep.subr.mxu0 0.0
    %1995 = vmatpush1.xpose.msra.mxu0 0.0
    %1996 = vmatprep.subr.mxu0 0.0
    %1997 = vmatpush1.xpose.msra.mxu0 0.0
    %1998 = vmatprep.subr.mxu0 0.0
    %1999 = vmatpush1.xpose.msra.mxu0 0.0
    %2000 = vmatprep.subr.mxu0 0.0
    %2001 = vmatpush1.xpose.msra.mxu0 0.0
    %2002 = vmatprep.subr.mxu0 0.0
    %2003 = vmatpush1.xpose.msra.mxu0 0.0
    %2004 = vmatprep.mubr.f32.mxu0 0.0
    %2005 = vmatmul.mubr.f32.gmra.mrb[0].mxu0 %v1932
    %v2006 = vpop.f32.mrb[0].mxu0
    %v2007 = vadd.f32 0.0, %v2006
    %v2008 = vpop.f32.mrb[0].mxu0
    %2009 = vmatprep.mubr.f32.mxu0 0.0
    %2010 = vmatmul.mubr.f32.gmra.mrb[0].mxu0 %v1934
    %v2011 = vpop.f32.mrb[0].mxu0
    %v2012 = vadd.f32 0.0, %v2011
    %v2013 = vpop.f32.mrb[0].mxu0
    %2014 = vdwg.mxu0
    %v2015 = vmul.f32 %v2007, 0.35355338
    %v2016 = vmul.f32 %v2012, 0.35355338
    %v2017 = vadd.f32 %v2015, %v1922
    %v2018 = vadd.f32 %v2016, %v1923
    %v2019 = vsel %vm454, %v2017, -inf
    %2020 = vmax.xlane.f32.xlu0 %v2019
    %v2021 = vpop.xlane.xlu0 %2020
    %v2022 = vsel %vm454, %v2018, -inf
    %2023 = vmax.xlane.f32.xlu0 %v2022
    %v2024 = vpop.xlane.xlu0 %2023
    %v2025 = vsub.f32 %v2017, %v2021
    %v2026 = vsub.f32 %v2018, %v2024
    %v2027 = vmul.f32 %v2025, 1.442695
    %v2028 = vpow.pop %v2027
    %v2029 = vmul.f32 %v2026, 1.442695
    %v2030 = vpow.pop %v2029
    %v2031 = vsel %vm454, %v2028, 0.0
    %2032 = vadd.xlane.f32.xlu0 %v2031
    %v2033 = vpop.xlane.xlu0 %2032
    %v2034 = vsel %vm454, %v2030, 0.0
    %2035 = vadd.xlane.f32.xlu0 %v2034
    %v2036 = vpop.xlane.xlu0 %2035
    %v2037 = vrcp.pop %v2033
    %v2038 = vrcp.pop %v2036
    %v2039 = vmul.f32 %v2028, %v2037
    %v2040 = vmul.f32 %v2030, %v2038
    %2041 = vrot.lane.b32.xlu0 %v177, 40
    %v2042 = vpop.permute.xlu0 %2041
    %2043 = vrot.lane.b32.xlu0 %v182, 40
    %v2044 = vpop.permute.xlu0 %2043
    %v2048 = vsel %vm454, %v2039, 0
    %v2051 = vsel %vm454, %v2040, 0
    %2053 = vmatprep.subr.mxu0 0.0
    %2054 = vmatpush1.msra.mxu0 %v2042
    %2055 = vmatprep.subr.mxu0 0.0
    %2056 = vmatpush1.msra.mxu0 %v2044
    %2057 = vmatprep.subr.mxu0 0.0
    %2058 = vmatpush1.msra.mxu0 0.0
    %2059 = vmatprep.subr.mxu0 0.0
    %2060 = vmatpush1.msra.mxu0 0.0
    %2061 = vmatprep.subr.mxu0 0.0
    %2062 = vmatpush1.msra.mxu0 0.0
    %2063 = vmatprep.subr.mxu0 0.0
    %2064 = vmatpush1.msra.mxu0 0.0
    %2065 = vmatprep.subr.mxu0 0.0
    %2066 = vmatpush1.msra.mxu0 0.0
    %2067 = vmatprep.subr.mxu0 0.0
    %2068 = vmatpush1.msra.mxu0 0.0
    %2069 = vmatprep.subr.mxu0 0.0
    %2070 = vmatpush1.msra.mxu0 0.0
    %2071 = vmatprep.subr.mxu0 0.0
    %2072 = vmatpush1.msra.mxu0 0.0
    %2073 = vmatprep.subr.mxu0 0.0
    %2074 = vmatpush1.msra.mxu0 0.0
    %2075 = vmatprep.subr.mxu0 0.0
    %2076 = vmatpush1.msra.mxu0 0.0
    %2077 = vmatprep.subr.mxu0 0.0
    %2078 = vmatpush1.msra.mxu0 0.0
    %2079 = vmatprep.subr.mxu0 0.0
    %2080 = vmatpush1.msra.mxu0 0.0
    %2081 = vmatprep.subr.mxu0 0.0
    %2082 = vmatpush1.msra.mxu0 0.0
    %2083 = vmatprep.subr.mxu0 0.0
    %2084 = vmatpush1.msra.mxu0 0.0
    %2085 = vmatprep.subr.mxu0 0.0
    %2086 = vmatpush1.msra.mxu0 0.0
    %2087 = vmatprep.subr.mxu0 0.0
    %2088 = vmatpush1.msra.mxu0 0.0
    %2089 = vmatprep.subr.mxu0 0.0
    %2090 = vmatpush1.msra.mxu0 0.0
    %2091 = vmatprep.subr.mxu0 0.0
    %2092 = vmatpush1.msra.mxu0 0.0
    %2093 = vmatprep.subr.mxu0 0.0
    %2094 = vmatpush1.msra.mxu0 0.0
    %2095 = vmatprep.subr.mxu0 0.0
    %2096 = vmatpush1.msra.mxu0 0.0
    %2097 = vmatprep.subr.mxu0 0.0
    %2098 = vmatpush1.msra.mxu0 0.0
    %2099 = vmatprep.subr.mxu0 0.0
    %2100 = vmatpush1.msra.mxu0 0.0
    %2101 = vmatprep.subr.mxu0 0.0
    %2102 = vmatpush1.msra.mxu0 0.0
    %2103 = vmatprep.subr.mxu0 0.0
    %2104 = vmatpush1.msra.mxu0 0.0
    %2105 = vmatprep.subr.mxu0 0.0
    %2106 = vmatpush1.msra.mxu0 0.0
    %2107 = vmatprep.subr.mxu0 0.0
    %2108 = vmatpush1.msra.mxu0 0.0
    %2109 = vmatprep.subr.mxu0 0.0
    %2110 = vmatpush1.msra.mxu0 0.0
    %2111 = vmatprep.subr.mxu0 0.0
    %2112 = vmatpush1.msra.mxu0 0.0
    %2113 = vmatprep.subr.mxu0 0.0
    %2114 = vmatpush1.msra.mxu0 0.0
    %2115 = vmatprep.subr.mxu0 0.0
    %2116 = vmatpush1.msra.mxu0 0.0
    %2117 = vmatprep.mubr.f32.mxu0 0.0
    %2118 = vmatmul.mubr.f32.gmra.mrb[0].mxu0 %v2048
    %v2119 = vpop.f32.mrb[0].mxu0
    %v2120 = vadd.f32 0.0, %v2119
    %v2121 = vpop.f32.mrb[0].mxu0
    %2122 = vmatprep.mubr.f32.mxu0 0.0
    %2123 = vmatmul.mubr.f32.gmra.mrb[0].mxu0 %v2051
    %v2124 = vpop.f32.mrb[0].mxu0
    %v2125 = vadd.f32 0.0, %v2124
    %v2126 = vpop.f32.mrb[0].mxu0
    %2127 = vdwg.mxu0
    %2130 = vrot.lane.b32.xlu0 %v2120, 24
    %v2131 = vpop.permute.xlu0 %2130
    %2132 = vrot.lane.b32.xlu0 %v2125, 24
    %v2133 = vpop.permute.xlu0 %2132
    %2136 = vst.msk [vmem:[#allocation2 + $0x10] sm:$0xff] %vm1911, %v2131
    %2137 = vst.msk [vmem:[#allocation2 + $0x18] sm:$0xff] %vm1911, %v2133
    %v2138 = vld [vmem:[#allocation2] sm:$0xff]
    %v2139 = vld [vmem:[#allocation2 + $0x8] sm:$0xff]
    %v2140 = vld [vmem:[#allocation2 + $0x10] sm:$0xff]
    %v2141 = vld [vmem:[#allocation2 + $0x18] sm:$0xff]
    %v2142 = vld [vmem:[%s7] sm:$0xff]
    %v2143 = vld [vmem:[%s7 + $0x8] sm:$0xff]
    %v2144 = vld [vmem:[%s7 + $0x10] sm:$0xff]
    %v2145 = vld [vmem:[%s7 + $0x18] sm:$0xff]
    %v2146 = vld [vmem:[%s8] sm:$0x1]
    %v2148 = vlaneseq
    %v2149 = vshrl.u32 %v2148, 7
    %v2150 = vsub.s32 0, %v2149
    %v2151 = vrot.slane %v2146, %v2150
    %v2154 = vsel %vm87, %v2138, 0
    %v2157 = vsel %vm87, %v2139, 0
    %v2160 = vsel %vm87, %v2140, 0
    %v2163 = vsel %vm87, %v2141, 0
    %2165 = vmatprep.subr.mxu0 0.0
    %2166 = vmatpush1.msra.mxu0 %v2142
    %2167 = vmatprep.subr.mxu0 0.0
    %2168 = vmatpush1.msra.mxu0 %v2143
    %2169 = vmatprep.subr.mxu0 0.0
    %2170 = vmatpush1.msra.mxu0 %v2144
    %2171 = vmatprep.subr.mxu0 0.0
    %2172 = vmatpush1.msra.mxu0 %v2145
    %2173 = vmatprep.subr.mxu0 0.0
    %2174 = vmatpush1.msra.mxu0 0.0
    %2175 = vmatprep.subr.mxu0 0.0
    %2176 = vmatpush1.msra.mxu0 0.0
    %2177 = vmatprep.subr.mxu0 0.0
    %2178 = vmatpush1.msra.mxu0 0.0
    %2179 = vmatprep.subr.mxu0 0.0
    %2180 = vmatpush1.msra.mxu0 0.0
    %2181 = vmatprep.subr.mxu0 0.0
    %2182 = vmatpush1.msra.mxu0 0.0
    %2183 = vmatprep.subr.mxu0 0.0
    %2184 = vmatpush1.msra.mxu0 0.0
    %2185 = vmatprep.subr.mxu0 0.0
    %2186 = vmatpush1.msra.mxu0 0.0
    %2187 = vmatprep.subr.mxu0 0.0
    %2188 = vmatpush1.msra.mxu0 0.0
    %2189 = vmatprep.subr.mxu0 0.0
    %2190 = vmatpush1.msra.mxu0 0.0
    %2191 = vmatprep.subr.mxu0 0.0
    %2192 = vmatpush1.msra.mxu0 0.0
    %2193 = vmatprep.subr.mxu0 0.0
    %2194 = vmatpush1.msra.mxu0 0.0
    %2195 = vmatprep.subr.mxu0 0.0
    %2196 = vmatpush1.msra.mxu0 0.0
    %2197 = vmatprep.subr.mxu0 0.0
    %2198 = vmatpush1.msra.mxu0 0.0
    %2199 = vmatprep.subr.mxu0 0.0
    %2200 = vmatpush1.msra.mxu0 0.0
    %2201 = vmatprep.subr.mxu0 0.0
    %2202 = vmatpush1.msra.mxu0 0.0
    %2203 = vmatprep.subr.mxu0 0.0
    %2204 = vmatpush1.msra.mxu0 0.0
    %2205 = vmatprep.subr.mxu0 0.0
    %2206 = vmatpush1.msra.mxu0 0.0
    %2207 = vmatprep.subr.mxu0 0.0
    %2208 = vmatpush1.msra.mxu0 0.0
    %2209 = vmatprep.subr.mxu0 0.0
    %2210 = vmatpush1.msra.mxu0 0.0
    %2211 = vmatprep.subr.mxu0 0.0
    %2212 = vmatpush1.msra.mxu0 0.0
    %2213 = vmatprep.subr.mxu0 0.0
    %2214 = vmatpush1.msra.mxu0 0.0
    %2215 = vmatprep.subr.mxu0 0.0
    %2216 = vmatpush1.msra.mxu0 0.0
    %2217 = vmatprep.subr.mxu0 0.0
    %2218 = vmatpush1.msra.mxu0 0.0
    %2219 = vmatprep.subr.mxu0 0.0
    %2220 = vmatpush1.msra.mxu0 0.0
    %2221 = vmatprep.subr.mxu0 0.0
    %2222 = vmatpush1.msra.mxu0 0.0
    %2223 = vmatprep.subr.mxu0 0.0
    %2224 = vmatpush1.msra.mxu0 0.0
    %2225 = vmatprep.subr.mxu0 0.0
    %2226 = vmatpush1.msra.mxu0 0.0
    %2227 = vmatprep.subr.mxu0 0.0
    %2228 = vmatpush1.msra.mxu0 0.0
    %2229 = vmatprep.mubr.f32.mxu0 0.0
    %2230 = vmatmul.mubr.f32.gmra.mrb[0].mxu0 %v2154
    %v2231 = vpop.f32.mrb[0].mxu0
    %v2232 = vadd.f32 %v2151, %v2231
    %v2233 = vpop.f32.mrb[0].mxu0
    %2234 = vmatprep.mubr.f32.mxu0 0.0
    %2235 = vmatmul.mubr.f32.gmra.mrb[0].mxu0 %v2157
    %v2236 = vpop.f32.mrb[0].mxu0
    %v2237 = vadd.f32 %v2151, %v2236
    %v2238 = vpop.f32.mrb[0].mxu0
    %2239 = vmatprep.mubr.f32.mxu0 0.0
    %2240 = vmatmul.mubr.f32.gmra.mrb[0].mxu0 %v2160
    %v2241 = vpop.f32.mrb[0].mxu0
    %v2242 = vadd.f32 %v2151, %v2241
    %v2243 = vpop.f32.mrb[0].mxu0
    %2244 = vmatprep.mubr.f32.mxu0 0.0
    %2245 = vmatmul.mubr.f32.gmra.mrb[0].mxu0 %v2163
    %v2246 = vpop.f32.mrb[0].mxu0
    %v2247 = vadd.f32 %v2151, %v2246
    %v2248 = vpop.f32.mrb[0].mxu0
    %2249 = vdwg.mxu0
    %2250 = vst.msk [vmem:[#allocation9] sm:$0xff] %vm87, %v2232
    %2251 = vst.msk [vmem:[#allocation9 + $0x8] sm:$0xff] %vm87, %v2237
    %2252 = vst.msk [vmem:[#allocation9 + $0x10] sm:$0xff] %vm87, %v2242
    %2253 = vst.msk [vmem:[#allocation9 + $0x18] sm:$0xff] %vm87, %v2247
    // Predicated region
    $region50: #{tpu_custom_call.1} parent=1 // pred_check
      _
    $region51: #{tpu_custom_call.1} parent=1 // pred_check_branch
      %2255 = sbr.rel (0) target = $region53
    $region52: #{tpu_custom_call.1} parent=1 // pred_region
      %s2257 = ssub.s32 512, 512
      %2258 = vsyncadd [#allocation5], %s2257
      %s2259 = sshll.u32 [#allocation9], 4
      %s2260 = int_to_ptr.vmem [resolvable:$true] %s2259
      %2265 = dma.vmem_to_hbm [thread:$0]  %s2260, 512, %s9, [#allocation5], 128, 128, 8
    $region53: #{tpu_custom_call.1} parent=1 // pred_fallthru
      _
    // Predicated region
    $region54: #{tpu_custom_call.1} parent=1 // pred_check
      _
    $region55: #{tpu_custom_call.1} parent=1 // pred_check_branch
      %2267 = sbr.rel (0) target = $region57
    $region56: #{tpu_custom_call.1} parent=1 // pred_region
      %2268 = dma.done [#allocation5], 512
    $region57: #{tpu_custom_call.1} parent=1 // pred_fallthru
      _
    %2269 = vsyncpa [#allocation4], 1
    %2270 = vsyncpa [#allocation7], 1
    %2271 = vsyncpa [#allocation5], 1

</llo_original>
